<compile_context>
chip_gen: v7x
topology: tpu7x:2x2x1
jax: 0.10.0
libtpu: 0.0.40
codegen_flags: <defaults>
</compile_context>

<pallas_src>
import functools

import jax
import jax.numpy as jnp
from jax.experimental import pallas as pl
from jax.experimental.pallas import tpu as pltpu

# ---- hyperparameters (MinimalWaveNet(in_channels=64, res_channels=32,
#      out_channels=64, num_blocks=2, num_layers=4)) ----
IN_CH = 64
RES_CH = 32
OUT_CH = 64
NUM_BLOCKS = 2
NUM_LAYERS = 4
NUM_DILATED = NUM_BLOCKS * NUM_LAYERS
BATCH = 2
SEQ_T = 32
PAD = 2 ** (NUM_LAYERS - 1)                         # max dilation = 8

# ---- packed weight buffer layout (rows x 64 lanes; every block 8-aligned) ---
# Weights are stored in PyTorch (out_ch, in_ch) orientation so the kernel
# computes W @ x directly in the channels-on-sublanes layout.
PACK_W = max(IN_CH, 2 * RES_CH, OUT_CH)             # 64 lanes
W01_OFF = 0                                         # fused dilated [W0 | W1]
W01_ROWS = NUM_DILATED * RES_CH                     # 8 * 32 = 256
W_IN_OFF = W01_OFF + W01_ROWS                       # 256  (RES_CH, IN_CH)
W_O1_OFF = W_IN_OFF + RES_CH                        # 288  (RES_CH, RES_CH)
W_O2_OFF = W_O1_OFF + RES_CH                        # 320  (OUT_CH, RES_CH)
B_IN_OFF = W_O2_OFF + OUT_CH                        # 384  column 0
BD_OFF = B_IN_OFF + RES_CH                          # 416  columns 0..7
B_O1_OFF = BD_OFF + RES_CH                          # 448  column 0
B_O2_OFF = B_O1_OFF + RES_CH                        # 480  column 0
PACK_ROWS = B_O2_OFF + OUT_CH                       # 544  (multiple of 8)


def wavenet_kernel(x_ref, w_ref, out_ref, hbuf, *, seq_t):
    """One batch element per grid step, NCW-native (channels x time) layout."""
    t = seq_t
    x = x_ref[...]                                          # (IN_CH, T)

    # input 1x1 conv:  h = W_in @ x + b_in       -> (RES_CH, T)
    w_in = w_ref[W_IN_OFF:W_IN_OFF + RES_CH, :]             # full 64-lane read
    b_in = w_ref[B_IN_OFF:B_IN_OFF + RES_CH, 0:1]           # (RES_CH, 1) column
    h = jnp.dot(w_in, x, preferred_element_type=jnp.float32) + b_in

    # causal-shift scratch: columns [0, PAD) stay zero, data lives at [PAD, PAD+T)
    hbuf[:, 0:PAD] = jnp.zeros((RES_CH, PAD), jnp.float32)

    # all dilated biases loaded once as one (RES_CH, NUM_DILATED) column block
    bdil = w_ref[BD_OFF:BD_OFF + RES_CH, 0:NUM_DILATED]

    # dilated residual stack (statically unrolled; dilations 1,2,4,8 x 2 blocks)
    for li in range(NUM_DILATED):
        d = 2 ** (li % NUM_LAYERS)
        # fused weights [W0 | W1] : (RES_CH, 2*RES_CH), full-width read
        w01 = w_ref[W01_OFF + li * RES_CH:W01_OFF + (li + 1) * RES_CH, :]
        res = h
        # causal shift via the zero-padded scratch (static offsets, no masks):
        #   h_prev[:, j] = h[:, j - d]  (zero for j < d)
        hbuf[:, PAD:PAD + t] = h
        h_prev = hbuf[:, PAD - d:PAD - d + t]               # (RES_CH, T)
        cat = jnp.concatenate([h_prev, h], axis=0)          # sublane concat (2*RES_CH, T)
        y = jnp.dot(w01, cat, preferred_element_type=jnp.float32) + bdil[:, li:li + 1]
        h = jnp.maximum(y, 0.0) + res

    # output head: relu(1x1) then 1x1
    w_o1 = w_ref[W_O1_OFF:W_O1_OFF + RES_CH, :RES_CH]
    b_o1 = w_ref[B_O1_OFF:B_O1_OFF + RES_CH, 0:1]
    w_o2 = w_ref[W_O2_OFF:W_O2_OFF + OUT_CH, :RES_CH]
    b_o2 = w_ref[B_O2_OFF:B_O2_OFF + OUT_CH, 0:1]
    o1 = jnp.maximum(
        jnp.dot(w_o1, h, preferred_element_type=jnp.float32) + b_o1, 0.0)
    o2 = jnp.dot(w_o2, o1, preferred_element_type=jnp.float32) + b_o2
    out_ref[...] = o2.astype(out_ref.dtype)                 # (OUT_CH, T), NCW-native


def minimal_wavenet_pallas(x_ncw, packed_w):
    """x_ncw: (B, IN_CH, T) float32 (PyTorch NCW). Returns (B, OUT_CH, T)."""
    B, Cin, T = x_ncw.shape
    assert Cin == IN_CH
    grid_spec = pltpu.PrefetchScalarGridSpec(
        num_scalar_prefetch=0,
        grid=(B,),
        in_specs=[
            pl.BlockSpec((None, IN_CH, T), lambda b: (b, 0, 0)),        # x[b]
            pl.BlockSpec((PACK_ROWS, PACK_W), lambda b: (0, 0)),        # weights resident
        ],
        out_specs=pl.BlockSpec((None, OUT_CH, T), lambda b: (b, 0, 0)),
        scratch_shapes=[pltpu.VMEM((RES_CH, PAD + T), jnp.float32)],    # causal shift buf
    )
    return pl.pallas_call(
        functools.partial(wavenet_kernel, seq_t=T),
        out_shape=jax.ShapeDtypeStruct((B, OUT_CH, T), jnp.float32),
        grid_spec=grid_spec,
        compiler_params=pltpu.CompilerParams(
            dimension_semantics=("parallel",)),   # v7x: batch shards over both TCs
    )(x_ncw, packed_w)


def init_params(key):
    """Deterministic synthetic weights in PyTorch (out_ch, in_ch) orientation."""
    ks = jax.random.split(key, 9)
    s = 0.1
    w_in = jax.random.normal(ks[0], (RES_CH, IN_CH), jnp.float32) * s
    b_in = jax.random.normal(ks[1], (RES_CH,), jnp.float32) * s
    # dilated conv k=2 weights: tap 0 = past (x[t-d]), tap 1 = current (x[t])
    w0s = jax.random.normal(ks[2], (NUM_DILATED, RES_CH, RES_CH), jnp.float32) * s
    w1s = jax.random.normal(ks[3], (NUM_DILATED, RES_CH, RES_CH), jnp.float32) * s
    bds = jax.random.normal(ks[4], (NUM_DILATED, RES_CH), jnp.float32) * s
    w_o1 = jax.random.normal(ks[5], (RES_CH, RES_CH), jnp.float32) * s
    b_o1 = jax.random.normal(ks[6], (RES_CH,), jnp.float32) * s
    w_o2 = jax.random.normal(ks[7], (OUT_CH, RES_CH), jnp.float32) * s
    b_o2 = jax.random.normal(ks[8], (OUT_CH,), jnp.float32) * s
    return (w_in, b_in, w0s, w1s, bds, w_o1, b_o1, w_o2, b_o2)


def params_from_conv1d_arrays(in_w, in_b, dil_ws, dil_bs, o1_w, o1_b, o2_w, o2_b):
    """Convert arrays shaped like PyTorch Conv1d parameters to the kernel tuple.

    Conv1d weights are (out_ch, in_ch, k).  For the kernel_size=2 dilated convs
    (padding=dilation, followed by the module's [..., :T] slice), tap k=0
    multiplies x[t - d] (past) and tap k=1 multiplies x[t] (current).
    """
    w0s = jnp.stack([w[..., 0] for w in dil_ws])
    w1s = jnp.stack([w[..., 1] for w in dil_ws])
    bds = jnp.stack(list(dil_bs))
    return (in_w[..., 0], in_b, w0s, w1s, bds,
            o1_w[..., 0], o1_b, o2_w[..., 0], o2_b)


def pack_params(params):
    """Pack all weights/biases into one (PACK_ROWS, PACK_W) f32 buffer."""
    w_in, b_in, w0s, w1s, bds, w_o1, b_o1, w_o2, b_o2 = params
    # Fuse the two dilated-conv taps along the contraction axis: [W0 | W1].
    w01 = jnp.concatenate([w0s, w1s], axis=2)            # (L, RES_CH, 2*RES_CH)
    buf = jnp.zeros((PACK_ROWS, PACK_W), jnp.float32)
    buf = buf.at[W01_OFF:W01_OFF + W01_ROWS, :2 * RES_CH].set(
        w01.reshape(W01_ROWS, 2 * RES_CH))
    buf = buf.at[W_IN_OFF:W_IN_OFF + RES_CH, :IN_CH].set(w_in)
    buf = buf.at[W_O1_OFF:W_O1_OFF + RES_CH, :RES_CH].set(w_o1)
    buf = buf.at[W_O2_OFF:W_O2_OFF + OUT_CH, :RES_CH].set(w_o2)
    # Biases stored as columns (per-channel down sublanes, broadcast along time).
    buf = buf.at[B_IN_OFF:B_IN_OFF + RES_CH, 0].set(b_in)
    buf = buf.at[BD_OFF:BD_OFF + RES_CH, :NUM_DILATED].set(bds.T)
    buf = buf.at[B_O1_OFF:B_O1_OFF + RES_CH, 0].set(b_o1)
    buf = buf.at[B_O2_OFF:B_O2_OFF + OUT_CH, 0].set(b_o2)
    return buf


def reference_jax(x_ncw, params):
    """Pure-JAX reference with identical semantics (for validation)."""
    w_in, b_in, w0s, w1s, bds, w_o1, b_o1, w_o2, b_o2 = params
    h = jnp.einsum('oi,bit->bot', w_in, x_ncw) + b_in[None, :, None]
    T = h.shape[-1]
    for li in range(NUM_DILATED):
        d = 2 ** (li % NUM_LAYERS)
        res = h
        h_prev = jnp.pad(h, ((0, 0), (0, 0), (d, 0)))[..., :T]
        y = (jnp.einsum('oi,bit->bot', w0s[li], h_prev)
             + jnp.einsum('oi,bit->bot', w1s[li], h)
             + bds[li][None, :, None])
        h = jax.nn.relu(y) + res
    o1 = jax.nn.relu(jnp.einsum('oi,bit->bot', w_o1, h) + b_o1[None, :, None])
    o2 = jnp.einsum('oi,bit->bot', w_o2, o1) + b_o2[None, :, None]
    return o2


if __name__ == "__main__":
    key = jax.random.PRNGKey(0)
    k_x, k_p = jax.random.split(key)
    x = jax.random.normal(k_x, (BATCH, IN_CH, SEQ_T), jnp.float32)  # NCW like PyTorch
    params = init_params(k_p)
    packed_w = pack_params(params)

    out = jax.block_until_ready(minimal_wavenet_pallas(x, packed_w))
    ref = jax.block_until_ready(reference_jax(x, params))

    assert out.shape == (BATCH, OUT_CH, SEQ_T), out.shape
    assert jnp.allclose(out, ref, atol=1e-4, rtol=1e-4), "mismatch vs reference"

    print("KERNEL_OK")
</pallas_src>

<mosaic_0001>
module attributes {stable_mosaic.version = 11 : i64} {
  func.func @wavenet_kernel(%arg0: i32, %arg1: memref<1x64x32xf32, #tpu.memory_space<vmem>>, %arg2: memref<544x64xf32, #tpu.memory_space<vmem>>, %arg3: memref<1x64x32xf32, #tpu.memory_space<vmem>>, %arg4: memref<32x40xf32, #tpu.memory_space<vmem>>) attributes {dimension_semantics = [#tpu.dimension_semantics<parallel>], iteration_bounds = array<i64: 2>, scalar_prefetch = 0 : i64, scratch_operands = 1 : i64, tpu.core_type = #tpu.core_type<tc>, window_params = [{transform_indices = @transform_0, window_bounds = array<i64: 1, 64, 32>}, {pipeline_mode = #tpu.pipeline_mode<synchronous>, transform_indices = @transform_1, window_bounds = array<i64: 544, 64>}, {transform_indices = @transform_2, window_bounds = array<i64: 1, 64, 32>}]} {
    %c0 = arith.constant 0 : index
    %c0_0 = arith.constant 0 : index
    %c0_1 = arith.constant 0 : index
    %0 = vector.load %arg1[%c0, %c0_0, %c0_1] : memref<1x64x32xf32, #tpu.memory_space<vmem>>, vector<1x64x32xf32>
    %1 = vector.shape_cast %0 : vector<1x64x32xf32> to vector<64x32xf32>
    %c256 = arith.constant 256 : index
    %c0_2 = arith.constant 0 : index
    %2 = vector.load %arg2[%c256, %c0_2] : memref<544x64xf32, #tpu.memory_space<vmem>>, vector<32x64xf32>
    %c384 = arith.constant 384 : index
    %c0_3 = arith.constant 0 : index
    %3 = vector.load %arg2[%c384, %c0_3] : memref<544x64xf32, #tpu.memory_space<vmem>>, vector<32x1xf32>
    %cst = arith.constant dense<0.000000e+00> : vector<32x32xf32>
    %4 = tpu.matmul %2, %1, %cst {dimension_numbers = #tpu.dot_dimension_numbers<[1], [0], [0], [1], [0, 0, 1, 1], [], []>} : vector<32x64xf32>, vector<64x32xf32>, vector<32x32xf32> -> vector<32x32xf32>
    %5 = vector.broadcast %3 : vector<32x1xf32> to vector<32x32xf32>
    %6 = arith.addf %4, %5 : vector<32x32xf32>
    %cst_4 = arith.constant 0.000000e+00 : f32
    %7 = vector.broadcast %cst_4 : f32 to vector<32x8xf32>
    %c0_5 = arith.constant 0 : index
    %c0_6 = arith.constant 0 : index
    %8 = vector.load %arg4[%c0_5, %c0_6] : memref<32x40xf32, #tpu.memory_space<vmem>>, vector<32x8xf32>
    tpu.vector_store %arg4[%c0_5, %c0_6], %7 {strides = array<i32>} : memref<32x40xf32, #tpu.memory_space<vmem>>, vector<32x8xf32>,
    %c416 = arith.constant 416 : index
    %c0_7 = arith.constant 0 : index
    %9 = vector.load %arg2[%c416, %c0_7] : memref<544x64xf32, #tpu.memory_space<vmem>>, vector<32x8xf32>
    %c0_8 = arith.constant 0 : index
    %c0_9 = arith.constant 0 : index
    %10 = vector.load %arg2[%c0_8, %c0_9] : memref<544x64xf32, #tpu.memory_space<vmem>>, vector<32x64xf32>
    %c0_10 = arith.constant 0 : index
    %c8 = arith.constant 8 : index
    %11 = vector.load %arg4[%c0_10, %c8] : memref<32x40xf32, #tpu.memory_space<vmem>>, vector<32x32xf32>
    tpu.vector_store %arg4[%c0_10, %c8], %6 {strides = array<i32>} : memref<32x40xf32, #tpu.memory_space<vmem>>, vector<32x32xf32>,
    %c0_11 = arith.constant 0 : index
    %c7 = arith.constant 7 : index
    %12 = vector.load %arg4[%c0_11, %c7] : memref<32x40xf32, #tpu.memory_space<vmem>>, vector<32x32xf32>
    %13 = tpu.concatenate %12, %6 in 0 : vector<32x32xf32>, vector<32x32xf32> -> vector<64x32xf32>
    %cst_12 = arith.constant dense<0.000000e+00> : vector<32x32xf32>
    %14 = tpu.matmul %10, %13, %cst_12 {dimension_numbers = #tpu.dot_dimension_numbers<[1], [0], [0], [1], [0, 0, 1, 1], [], []>} : vector<32x64xf32>, vector<64x32xf32>, vector<32x32xf32> -> vector<32x32xf32>
    %15 = vector.extract_strided_slice %9 {offsets = [0, 0], sizes = [32, 1], strides = [1, 1]} : vector<32x8xf32> to vector<32x1xf32>
    %16 = vector.broadcast %15 : vector<32x1xf32> to vector<32x32xf32>
    %17 = arith.addf %14, %16 : vector<32x32xf32>
    %cst_13 = arith.constant 0.000000e+00 : f32
    %18 = vector.broadcast %cst_13 : f32 to vector<32x32xf32>
    %19 = arith.maximumf %17, %18 : vector<32x32xf32>
    %20 = arith.addf %19, %6 : vector<32x32xf32>
    %c32 = arith.constant 32 : index
    %c0_14 = arith.constant 0 : index
    %21 = vector.load %arg2[%c32, %c0_14] : memref<544x64xf32, #tpu.memory_space<vmem>>, vector<32x64xf32>
    %c0_15 = arith.constant 0 : index
    %c8_16 = arith.constant 8 : index
    %22 = vector.load %arg4[%c0_15, %c8_16] : memref<32x40xf32, #tpu.memory_space<vmem>>, vector<32x32xf32>
    tpu.vector_store %arg4[%c0_15, %c8_16], %20 {strides = array<i32>} : memref<32x40xf32, #tpu.memory_space<vmem>>, vector<32x32xf32>,
    %c0_17 = arith.constant 0 : index
    %c6 = arith.constant 6 : index
    %23 = vector.load %arg4[%c0_17, %c6] : memref<32x40xf32, #tpu.memory_space<vmem>>, vector<32x32xf32>
    %24 = tpu.concatenate %23, %20 in 0 : vector<32x32xf32>, vector<32x32xf32> -> vector<64x32xf32>
    %cst_18 = arith.constant dense<0.000000e+00> : vector<32x32xf32>
    %25 = tpu.matmul %21, %24, %cst_18 {dimension_numbers = #tpu.dot_dimension_numbers<[1], [0], [0], [1], [0, 0, 1, 1], [], []>} : vector<32x64xf32>, vector<64x32xf32>, vector<32x32xf32> -> vector<32x32xf32>
    %26 = vector.extract_strided_slice %9 {offsets = [0, 1], sizes = [32, 1], strides = [1, 1]} : vector<32x8xf32> to vector<32x1xf32>
    %27 = vector.broadcast %26 : vector<32x1xf32> to vector<32x32xf32>
    %28 = arith.addf %25, %27 : vector<32x32xf32>
    %cst_19 = arith.constant 0.000000e+00 : f32
    %29 = vector.broadcast %cst_19 : f32 to vector<32x32xf32>
    %30 = arith.maximumf %28, %29 : vector<32x32xf32>
    %31 = arith.addf %30, %20 : vector<32x32xf32>
    %c64 = arith.constant 64 : index
    %c0_20 = arith.constant 0 : index
    %32 = vector.load %arg2[%c64, %c0_20] : memref<544x64xf32, #tpu.memory_space<vmem>>, vector<32x64xf32>
    %c0_21 = arith.constant 0 : index
    %c8_22 = arith.constant 8 : index
    %33 = vector.load %arg4[%c0_21, %c8_22] : memref<32x40xf32, #tpu.memory_space<vmem>>, vector<32x32xf32>
    tpu.vector_store %arg4[%c0_21, %c8_22], %31 {strides = array<i32>} : memref<32x40xf32, #tpu.memory_space<vmem>>, vector<32x32xf32>,
    %c0_23 = arith.constant 0 : index
    %c4 = arith.constant 4 : index
    %34 = vector.load %arg4[%c0_23, %c4] : memref<32x40xf32, #tpu.memory_space<vmem>>, vector<32x32xf32>
    %35 = tpu.concatenate %34, %31 in 0 : vector<32x32xf32>, vector<32x32xf32> -> vector<64x32xf32>
    %cst_24 = arith.constant dense<0.000000e+00> : vector<32x32xf32>
    %36 = tpu.matmul %32, %35, %cst_24 {dimension_numbers = #tpu.dot_dimension_numbers<[1], [0], [0], [1], [0, 0, 1, 1], [], []>} : vector<32x64xf32>, vector<64x32xf32>, vector<32x32xf32> -> vector<32x32xf32>
    %37 = vector.extract_strided_slice %9 {offsets = [0, 2], sizes = [32, 1], strides = [1, 1]} : vector<32x8xf32> to vector<32x1xf32>
    %38 = vector.broadcast %37 : vector<32x1xf32> to vector<32x32xf32>
    %39 = arith.addf %36, %38 : vector<32x32xf32>
    %cst_25 = arith.constant 0.000000e+00 : f32
    %40 = vector.broadcast %cst_25 : f32 to vector<32x32xf32>
    %41 = arith.maximumf %39, %40 : vector<32x32xf32>
    %42 = arith.addf %41, %31 : vector<32x32xf32>
    %c96 = arith.constant 96 : index
    %c0_26 = arith.constant 0 : index
    %43 = vector.load %arg2[%c96, %c0_26] : memref<544x64xf32, #tpu.memory_space<vmem>>, vector<32x64xf32>
    %c0_27 = arith.constant 0 : index
    %c8_28 = arith.constant 8 : index
    %44 = vector.load %arg4[%c0_27, %c8_28] : memref<32x40xf32, #tpu.memory_space<vmem>>, vector<32x32xf32>
    tpu.vector_store %arg4[%c0_27, %c8_28], %42 {strides = array<i32>} : memref<32x40xf32, #tpu.memory_space<vmem>>, vector<32x32xf32>,
    %c0_29 = arith.constant 0 : index
    %c0_30 = arith.constant 0 : index
    %45 = vector.load %arg4[%c0_29, %c0_30] : memref<32x40xf32, #tpu.memory_space<vmem>>, vector<32x32xf32>
    %46 = tpu.concatenate %45, %42 in 0 : vector<32x32xf32>, vector<32x32xf32> -> vector<64x32xf32>
    %cst_31 = arith.constant dense<0.000000e+00> : vector<32x32xf32>
    %47 = tpu.matmul %43, %46, %cst_31 {dimension_numbers = #tpu.dot_dimension_numbers<[1], [0], [0], [1], [0, 0, 1, 1], [], []>} : vector<32x64xf32>, vector<64x32xf32>, vector<32x32xf32> -> vector<32x32xf32>
    %48 = vector.extract_strided_slice %9 {offsets = [0, 3], sizes = [32, 1], strides = [1, 1]} : vector<32x8xf32> to vector<32x1xf32>
    %49 = vector.broadcast %48 : vector<32x1xf32> to vector<32x32xf32>
    %50 = arith.addf %47, %49 : vector<32x32xf32>
    %cst_32 = arith.constant 0.000000e+00 : f32
    %51 = vector.broadcast %cst_32 : f32 to vector<32x32xf32>
    %52 = arith.maximumf %50, %51 : vector<32x32xf32>
    %53 = arith.addf %52, %42 : vector<32x32xf32>
    %c128 = arith.constant 128 : index
    %c0_33 = arith.constant 0 : index
    %54 = vector.load %arg2[%c128, %c0_33] : memref<544x64xf32, #tpu.memory_space<vmem>>, vector<32x64xf32>
    %c0_34 = arith.constant 0 : index
    %c8_35 = arith.constant 8 : index
    %55 = vector.load %arg4[%c0_34, %c8_35] : memref<32x40xf32, #tpu.memory_space<vmem>>, vector<32x32xf32>
    tpu.vector_store %arg4[%c0_34, %c8_35], %53 {strides = array<i32>} : memref<32x40xf32, #tpu.memory_space<vmem>>, vector<32x32xf32>,
    %c0_36 = arith.constant 0 : index
    %c7_37 = arith.constant 7 : index
    %56 = vector.load %arg4[%c0_36, %c7_37] : memref<32x40xf32, #tpu.memory_space<vmem>>, vector<32x32xf32>
    %57 = tpu.concatenate %56, %53 in 0 : vector<32x32xf32>, vector<32x32xf32> -> vector<64x32xf32>
    %cst_38 = arith.constant dense<0.000000e+00> : vector<32x32xf32>
    %58 = tpu.matmul %54, %57, %cst_38 {dimension_numbers = #tpu.dot_dimension_numbers<[1], [0], [0], [1], [0, 0, 1, 1], [], []>} : vector<32x64xf32>, vector<64x32xf32>, vector<32x32xf32> -> vector<32x32xf32>
    %59 = vector.extract_strided_slice %9 {offsets = [0, 4], sizes = [32, 1], strides = [1, 1]} : vector<32x8xf32> to vector<32x1xf32>
    %60 = vector.broadcast %59 : vector<32x1xf32> to vector<32x32xf32>
    %61 = arith.addf %58, %60 : vector<32x32xf32>
    %cst_39 = arith.constant 0.000000e+00 : f32
    %62 = vector.broadcast %cst_39 : f32 to vector<32x32xf32>
    %63 = arith.maximumf %61, %62 : vector<32x32xf32>
    %64 = arith.addf %63, %53 : vector<32x32xf32>
    %c160 = arith.constant 160 : index
    %c0_40 = arith.constant 0 : index
    %65 = vector.load %arg2[%c160, %c0_40] : memref<544x64xf32, #tpu.memory_space<vmem>>, vector<32x64xf32>
    %c0_41 = arith.constant 0 : index
    %c8_42 = arith.constant 8 : index
    %66 = vector.load %arg4[%c0_41, %c8_42] : memref<32x40xf32, #tpu.memory_space<vmem>>, vector<32x32xf32>
    tpu.vector_store %arg4[%c0_41, %c8_42], %64 {strides = array<i32>} : memref<32x40xf32, #tpu.memory_space<vmem>>, vector<32x32xf32>,
    %c0_43 = arith.constant 0 : index
    %c6_44 = arith.constant 6 : index
    %67 = vector.load %arg4[%c0_43, %c6_44] : memref<32x40xf32, #tpu.memory_space<vmem>>, vector<32x32xf32>
    %68 = tpu.concatenate %67, %64 in 0 : vector<32x32xf32>, vector<32x32xf32> -> vector<64x32xf32>
    %cst_45 = arith.constant dense<0.000000e+00> : vector<32x32xf32>
    %69 = tpu.matmul %65, %68, %cst_45 {dimension_numbers = #tpu.dot_dimension_numbers<[1], [0], [0], [1], [0, 0, 1, 1], [], []>} : vector<32x64xf32>, vector<64x32xf32>, vector<32x32xf32> -> vector<32x32xf32>
    %70 = vector.extract_strided_slice %9 {offsets = [0, 5], sizes = [32, 1], strides = [1, 1]} : vector<32x8xf32> to vector<32x1xf32>
    %71 = vector.broadcast %70 : vector<32x1xf32> to vector<32x32xf32>
    %72 = arith.addf %69, %71 : vector<32x32xf32>
    %cst_46 = arith.constant 0.000000e+00 : f32
    %73 = vector.broadcast %cst_46 : f32 to vector<32x32xf32>
    %74 = arith.maximumf %72, %73 : vector<32x32xf32>
    %75 = arith.addf %74, %64 : vector<32x32xf32>
    %c192 = arith.constant 192 : index
    %c0_47 = arith.constant 0 : index
    %76 = vector.load %arg2[%c192, %c0_47] : memref<544x64xf32, #tpu.memory_space<vmem>>, vector<32x64xf32>
    %c0_48 = arith.constant 0 : index
    %c8_49 = arith.constant 8 : index
    %77 = vector.load %arg4[%c0_48, %c8_49] : memref<32x40xf32, #tpu.memory_space<vmem>>, vector<32x32xf32>
    tpu.vector_store %arg4[%c0_48, %c8_49], %75 {strides = array<i32>} : memref<32x40xf32, #tpu.memory_space<vmem>>, vector<32x32xf32>,
    %c0_50 = arith.constant 0 : index
    %c4_51 = arith.constant 4 : index
    %78 = vector.load %arg4[%c0_50, %c4_51] : memref<32x40xf32, #tpu.memory_space<vmem>>, vector<32x32xf32>
    %79 = tpu.concatenate %78, %75 in 0 : vector<32x32xf32>, vector<32x32xf32> -> vector<64x32xf32>
    %cst_52 = arith.constant dense<0.000000e+00> : vector<32x32xf32>
    %80 = tpu.matmul %76, %79, %cst_52 {dimension_numbers = #tpu.dot_dimension_numbers<[1], [0], [0], [1], [0, 0, 1, 1], [], []>} : vector<32x64xf32>, vector<64x32xf32>, vector<32x32xf32> -> vector<32x32xf32>
    %81 = vector.extract_strided_slice %9 {offsets = [0, 6], sizes = [32, 1], strides = [1, 1]} : vector<32x8xf32> to vector<32x1xf32>
    %82 = vector.broadcast %81 : vector<32x1xf32> to vector<32x32xf32>
    %83 = arith.addf %80, %82 : vector<32x32xf32>
    %cst_53 = arith.constant 0.000000e+00 : f32
    %84 = vector.broadcast %cst_53 : f32 to vector<32x32xf32>
    %85 = arith.maximumf %83, %84 : vector<32x32xf32>
    %86 = arith.addf %85, %75 : vector<32x32xf32>
    %c224 = arith.constant 224 : index
    %c0_54 = arith.constant 0 : index
    %87 = vector.load %arg2[%c224, %c0_54] : memref<544x64xf32, #tpu.memory_space<vmem>>, vector<32x64xf32>
    %c0_55 = arith.constant 0 : index
    %c8_56 = arith.constant 8 : index
    %88 = vector.load %arg4[%c0_55, %c8_56] : memref<32x40xf32, #tpu.memory_space<vmem>>, vector<32x32xf32>
    tpu.vector_store %arg4[%c0_55, %c8_56], %86 {strides = array<i32>} : memref<32x40xf32, #tpu.memory_space<vmem>>, vector<32x32xf32>,
    %c0_57 = arith.constant 0 : index
    %c0_58 = arith.constant 0 : index
    %89 = vector.load %arg4[%c0_57, %c0_58] : memref<32x40xf32, #tpu.memory_space<vmem>>, vector<32x32xf32>
    %90 = tpu.concatenate %89, %86 in 0 : vector<32x32xf32>, vector<32x32xf32> -> vector<64x32xf32>
    %cst_59 = arith.constant dense<0.000000e+00> : vector<32x32xf32>
    %91 = tpu.matmul %87, %90, %cst_59 {dimension_numbers = #tpu.dot_dimension_numbers<[1], [0], [0], [1], [0, 0, 1, 1], [], []>} : vector<32x64xf32>, vector<64x32xf32>, vector<32x32xf32> -> vector<32x32xf32>
    %92 = vector.extract_strided_slice %9 {offsets = [0, 7], sizes = [32, 1], strides = [1, 1]} : vector<32x8xf32> to vector<32x1xf32>
    %93 = vector.broadcast %92 : vector<32x1xf32> to vector<32x32xf32>
    %94 = arith.addf %91, %93 : vector<32x32xf32>
    %cst_60 = arith.constant 0.000000e+00 : f32
    %95 = vector.broadcast %cst_60 : f32 to vector<32x32xf32>
    %96 = arith.maximumf %94, %95 : vector<32x32xf32>
    %97 = arith.addf %96, %86 : vector<32x32xf32>
    %c288 = arith.constant 288 : index
    %c0_61 = arith.constant 0 : index
    %98 = vector.load %arg2[%c288, %c0_61] : memref<544x64xf32, #tpu.memory_space<vmem>>, vector<32x32xf32>
    %c448 = arith.constant 448 : index
    %c0_62 = arith.constant 0 : index
    %99 = vector.load %arg2[%c448, %c0_62] : memref<544x64xf32, #tpu.memory_space<vmem>>, vector<32x1xf32>
    %c320 = arith.constant 320 : index
    %c0_63 = arith.constant 0 : index
    %100 = vector.load %arg2[%c320, %c0_63] : memref<544x64xf32, #tpu.memory_space<vmem>>, vector<64x32xf32>
    %c480 = arith.constant 480 : index
    %c0_64 = arith.constant 0 : index
    %101 = vector.load %arg2[%c480, %c0_64] : memref<544x64xf32, #tpu.memory_space<vmem>>, vector<64x1xf32>
    %cst_65 = arith.constant dense<0.000000e+00> : vector<32x32xf32>
    %102 = tpu.matmul %98, %97, %cst_65 {dimension_numbers = #tpu.dot_dimension_numbers<[1], [0], [0], [1], [0, 0, 1, 1], [], []>} : vector<32x32xf32>, vector<32x32xf32>, vector<32x32xf32> -> vector<32x32xf32>
    %103 = vector.broadcast %99 : vector<32x1xf32> to vector<32x32xf32>
    %104 = arith.addf %102, %103 : vector<32x32xf32>
    %cst_66 = arith.constant 0.000000e+00 : f32
    %105 = vector.broadcast %cst_66 : f32 to vector<32x32xf32>
    %106 = arith.maximumf %104, %105 : vector<32x32xf32>
    %cst_67 = arith.constant dense<0.000000e+00> : vector<64x32xf32>
    %107 = tpu.matmul %100, %106, %cst_67 {dimension_numbers = #tpu.dot_dimension_numbers<[1], [0], [0], [1], [0, 0, 1, 1], [], []>} : vector<64x32xf32>, vector<32x32xf32>, vector<64x32xf32> -> vector<64x32xf32>
    %108 = vector.broadcast %101 : vector<64x1xf32> to vector<64x32xf32>
    %109 = arith.addf %107, %108 : vector<64x32xf32>
    %c0_68 = arith.constant 0 : index
    %c0_69 = arith.constant 0 : index
    %c0_70 = arith.constant 0 : index
    %110 = vector.load %arg3[%c0_68, %c0_69, %c0_70] : memref<1x64x32xf32, #tpu.memory_space<vmem>>, vector<1x64x32xf32>
    %111 = vector.shape_cast %110 : vector<1x64x32xf32> to vector<64x32xf32>
    %112 = vector.shape_cast %109 : vector<64x32xf32> to vector<1x64x32xf32>
    tpu.vector_store %arg3[%c0_68, %c0_69, %c0_70], %112 {strides = array<i32>} : memref<1x64x32xf32, #tpu.memory_space<vmem>>, vector<1x64x32xf32>,
    return
  }
  func.func @transform_0(%arg0: i32) -> (i32, i32, i32) {
    %c0_i32 = arith.constant 0 : i32
    %c0_i32_0 = arith.constant 0 : i32
    %c0_i32_1 = arith.constant 0 : i32
    return %arg0, %c0_i32, %c0_i32_0 : i32, i32, i32
  }
  func.func @transform_1(%arg0: i32) -> (i32, i32) {
    %c0_i32 = arith.constant 0 : i32
    %c0_i32_0 = arith.constant 0 : i32
    %c0_i32_1 = arith.constant 0 : i32
    return %c0_i32, %c0_i32_0 : i32, i32
  }
  func.func @transform_2(%arg0: i32) -> (i32, i32, i32) {
    %c0_i32 = arith.constant 0 : i32
    %c0_i32_0 = arith.constant 0 : i32
    %c0_i32_1 = arith.constant 0 : i32
    return %arg0, %c0_i32, %c0_i32_0 : i32, i32, i32
  }
}

</mosaic_0001>

<llo_original>
// kernel: tpu_custom_call.1
$region0: #{tpu_custom_call.1}
  #allocation0 [shape = 'u32[]', space=smem, size = 0x4, offset = 0x4, fixed_abs, tag = 'smem constant byte address 0x4 - core index']
  #allocation1 [shape = 'u32[144,128]{1,0:T(1,128)}', space=vmem, size = 0x12000, scoped, tag = 'internal scratch']
  #allocation2 [shape = 'f32[32,40]{1,0:T(8,128)}', space=vmem, size = 0x4000, scoped, tag = 'scratch operand']
  %s0 = inlined_call_operand.vmem [shape: f32[2,64,32], index: 0, kind: input, shape index: {}]
  %s1 = inlined_call_operand.vmem [shape: f32[544,64], index: 1, kind: input, shape index: {}]
  %s2 = inlined_call_operand.vmem [shape: f32[2,64,32], index: 2, kind: output, shape index: {}]
  %s3 = sld [smem:[#allocation0]]
  $region41: #{tpu_custom_call.1} parent=0
    _
  %s5 = ssub.s32 1, %s3
  %s6 = scalar_select 0, %s5, %s3
  loop: start=0, step=1, limit=4
  $region2: #{tpu_custom_call.1} parent=0 // loop_pre_header
    _
  $region3: #{tpu_custom_call.1} parent=0 // loop_header
    %s8 = sphi 0, %s12
    %p9 = scmp.ge.s32.totalorder %s8, 4
    %s18 = sphi 0, %s20
    %s21 = sphi 0, %s18
    %s22 = sphi 0, %s21
    %s38 = sphi 0, %s22
    %s42 = sphi 0, %s42
    %s44 = sphi 0, %s42
    %s45 = sphi 0, %s44
    %s59 = sphi 0, %s45
    %s65 = sphi 0, %s67
    %s68 = sphi 0, %s65
    %s69 = sphi 0, %s68
    %s85 = sphi 0, %s69
  $region4: #{tpu_custom_call.1} parent=0 // loop_header_branch
    %11 = sbr.rel (%p9) target = $region8
  $region5: #{tpu_custom_call.1} parent=0 // loop_body
    %s13 = ssub.s32 %s8, 1
    %s14 = ssub.s32 %s8, 2
    %s15 = sadd.s32 %s8, 1
    %s16 = ssub.s32 %s8, %s15
    %p17 = scmp.eq.s32.totalorder %s16, 0
    %s19 = sadd.s32 %s18, 1
    %s20 = scalar_select %p17, %s18, %s19
    %p23 = pneg %p17
    %p24 = scmp.eq.s32.totalorder %s8, 1
    %p25 = por %p23, %p24
    %p26 = scmp.ne.s32.totalorder %s18, %s21
    %p27 = scmp.eq.s32.totalorder %s8, 0
    %p28 = por %p26, %p27
    %p29 = scmp.ne.s32.totalorder %s18, %s21
    %p30 = scmp.eq.s32.totalorder %s13, 1
    %p31 = por %p29, %p30
    %p32 = scmp.ne.s32.totalorder %s21, %s22
    %p33 = scmp.eq.s32.totalorder %s13, 0
    %p34 = por %p32, %p33
    %p35 = scmp.ne.s32.totalorder %s21, %s22
    %p36 = scmp.eq.s32.totalorder %s14, 1
    %p37 = por %p35, %p36
    %p39 = scmp.ne.s32.totalorder %s22, %s38
    %p40 = scmp.eq.s32.totalorder %s14, 0
    %p41 = por %p39, %p40
    %s43 = sadd.s32 %s42, 1
    %p46 = scmp.eq.s32.totalorder %s8, 1
    %p47 = scmp.ne.s32.totalorder %s42, %s44
    %p48 = scmp.eq.s32.totalorder %s8, 0
    %p49 = por %p47, %p48
    %p50 = scmp.ne.s32.totalorder %s42, %s44
    %p51 = scmp.eq.s32.totalorder %s13, 1
    %p52 = por %p50, %p51
    %p53 = scmp.ne.s32.totalorder %s44, %s45
    %p54 = scmp.eq.s32.totalorder %s13, 0
    %p55 = por %p53, %p54
    %p56 = scmp.ne.s32.totalorder %s44, %s45
    %p57 = scmp.eq.s32.totalorder %s14, 1
    %p58 = por %p56, %p57
    %p60 = scmp.ne.s32.totalorder %s45, %s59
    %p61 = scmp.eq.s32.totalorder %s14, 0
    %p62 = por %p60, %p61
    %s63 = ssub.s32 %s8, %s15
    %p64 = scmp.eq.s32.totalorder %s63, 0
    %s66 = sadd.s32 %s65, 1
    %s67 = scalar_select %p64, %s65, %s66
    %p70 = pneg %p64
    %p71 = scmp.eq.s32.totalorder %s8, 1
    %p72 = por %p70, %p71
    %p73 = scmp.ne.s32.totalorder %s65, %s68
    %p74 = scmp.eq.s32.totalorder %s8, 0
    %p75 = por %p73, %p74
    %p76 = scmp.ne.s32.totalorder %s65, %s68
    %p77 = scmp.eq.s32.totalorder %s13, 1
    %p78 = por %p76, %p77
    %p79 = scmp.ne.s32.totalorder %s68, %s69
    %p80 = scmp.eq.s32.totalorder %s13, 0
    %p81 = por %p79, %p80
    %p82 = scmp.ne.s32.totalorder %s68, %s69
    %p83 = scmp.eq.s32.totalorder %s14, 1
    %p84 = por %p82, %p83
    %p86 = scmp.ne.s32.totalorder %s69, %s85
    %p87 = scmp.eq.s32.totalorder %s14, 0
    %p88 = por %p86, %p87
    %p89 = scmp.le.s32.totalorder 1, %s8
    %p90 = scmp.lt.s32.totalorder %s8, 3
    %p91 = pnand %p89, %p90
    %p92 = pneg %p91
    // Predicated region
    $region9: #{tpu_custom_call.1} parent=5 // pred_check
      _
    $region10: #{tpu_custom_call.1} parent=5 // pred_check_branch
      %94 = sbr.rel (%p91) target = $region12
    $region11: #{tpu_custom_call.1} parent=5 // pred_region
      %s95 = ssub.s32 %s8, 1
      // Predicated region
      $region13: #{tpu_custom_call.1} parent=11 // pred_check
        %p96 = pneg %p55
      $region14: #{tpu_custom_call.1} parent=11 // pred_check_branch
        %98 = sbr.rel (%p96) target = $region16
      $region15: #{tpu_custom_call.1} parent=11 // pred_region
        _
      $region16: #{tpu_custom_call.1} parent=11 // pred_fallthru
        _
    $region12: #{tpu_custom_call.1} parent=5 // pred_fallthru
      _
    %p99 = scmp.lt.s32.totalorder %s8, 2
    // Predicated region
    $region17: #{tpu_custom_call.1} parent=5 // pred_check
      %p100 = pneg %p99
    $region18: #{tpu_custom_call.1} parent=5 // pred_check_branch
      %102 = sbr.rel (%p100) target = $region20
    $region19: #{tpu_custom_call.1} parent=5 // pred_region
      // Predicated region
      $region21: #{tpu_custom_call.1} parent=19 // pred_check
        %p103 = pneg %p28
      $region22: #{tpu_custom_call.1} parent=19 // pred_check_branch
        %105 = sbr.rel (%p103) target = $region24
      $region23: #{tpu_custom_call.1} parent=19 // pred_region
        %p106 = scmp.lt.s32.totalorder %s8, 1
        %s107 = scalar_select %p106, %s8, 1
        %s108 = smul.addr %s107, 8
        %s109 = smul.addr %s108, 8
        %s110 = scalar_lea.vmem %s0, %s109
      $region24: #{tpu_custom_call.1} parent=19 // pred_fallthru
        _
    $region20: #{tpu_custom_call.1} parent=5 // pred_fallthru
      _
    %p111 = scmp.le.s32.totalorder 1, %s8
    %p112 = scmp.lt.s32.totalorder %s8, 3
    %p113 = pnand %p111, %p112
    %p114 = pneg %p113
    // Predicated region
    $region25: #{tpu_custom_call.1} parent=5 // pred_check
      _
    $region26: #{tpu_custom_call.1} parent=5 // pred_check_branch
      %116 = sbr.rel (%p113) target = $region28
    $region27: #{tpu_custom_call.1} parent=5 // pred_region
      %s117 = ssub.s32 %s8, 1
      %p118 = scmp.lt.s32.totalorder %s13, 1
      %s119 = scalar_select %p118, %s13, 1
      %s120 = smul.addr %s119, 8
      %s121 = smul.addr %s120, 8
      %s122 = scalar_lea.vmem %s0, %s121
      %p123 = pneg %p34
      %p124 = pneg %p31
      %p125 = pneg %p55
      %p126 = pneg %p52
      %p127 = pneg %p81
      %p128 = pneg %p78
      %p129 = scmp.lt.s32.totalorder %s13, 1
      %s130 = scalar_select %p129, %s13, 1
      %s131 = smul.addr %s130, 8
      %s132 = smul.addr %s131, 8
      %s133 = scalar_lea.vmem %s2, %s132
      %p134 = scmp.lt.s32.totalorder %s13, 1
      %s135 = scalar_select %p134, %s13, 1
      %s136 = smul.addr %s135, 8
      %s137 = smul.addr %s136, 8
      %s138 = scalar_lea.vmem %s0, %s137
      %p139 = scmp.lt.s32.totalorder %s13, 1
      %s140 = scalar_select %p139, %s13, 1
      %s141 = smul.addr %s140, 8
      %s142 = smul.addr %s141, 8
      %s143 = scalar_lea.vmem %s2, %s142
      %v144 = vld [vmem:[%s138] sm:$0xff]
      %v145 = vld [vmem:[%s138 + $0x8] sm:$0xff]
      %v146 = vld [vmem:[%s138 + $0x10] sm:$0xff]
      %v147 = vld [vmem:[%s138 + $0x18] sm:$0xff]
      %v148 = vld [vmem:[%s138 + $0x20] sm:$0xff]
      %v149 = vld [vmem:[%s138 + $0x28] sm:$0xff]
      %v150 = vld [vmem:[%s138 + $0x30] sm:$0xff]
      %v151 = vld [vmem:[%s138 + $0x38] sm:$0xff]
      %v152 = vld [vmem:[%s1 + $0x100] sm:$0xff]
      %v153 = vld [vmem:[%s1 + $0x108] sm:$0xff]
      %v154 = vld [vmem:[%s1 + $0x110] sm:$0xff]
      %v155 = vld [vmem:[%s1 + $0x118] sm:$0xff]
      %v156 = vld [vmem:[%s1 + $0x180] sm:$0xff]
      %v157 = vld [vmem:[%s1 + $0x188] sm:$0xff]
      %v158 = vld [vmem:[%s1 + $0x190] sm:$0xff]
      %v159 = vld [vmem:[%s1 + $0x198] sm:$0xff]
      %161 = vset.pattern.permute.xlu0 0
      %162 = vperm.xlu0 %161, %v156
      %v163 = vpop.permute.xlu0 %162
      %166 = vset.pattern.permute.xlu0 0
      %167 = vperm.xlu0 %166, %v157
      %v168 = vpop.permute.xlu0 %167
      %171 = vset.pattern.permute.xlu0 0
      %172 = vperm.xlu0 %171, %v158
      %v173 = vpop.permute.xlu0 %172
      %176 = vset.pattern.permute.xlu0 0
      %177 = vperm.xlu0 %176, %v159
      %v178 = vpop.permute.xlu0 %177
      %vm180 = vcmask 523264
      %v182 = vsel %vm180, %v152, 0
      %v185 = vsel %vm180, %v153, 0
      %v188 = vsel %vm180, %v154, 0
      %v191 = vsel %vm180, %v155, 0
      %193 = vmatprep.subr.mxu0 0.0
      %194 = vmatpush1.msra.mxu0 %v144
      %195 = vmatprep.subr.mxu0 0.0
      %196 = vmatpush1.msra.mxu0 %v145
      %197 = vmatprep.subr.mxu0 0.0
      %198 = vmatpush1.msra.mxu0 %v146
      %199 = vmatprep.subr.mxu0 0.0
      %200 = vmatpush1.msra.mxu0 %v147
      %201 = vmatprep.subr.mxu0 0.0
      %202 = vmatpush1.msra.mxu0 %v148
      %203 = vmatprep.subr.mxu0 0.0
      %204 = vmatpush1.msra.mxu0 %v149
      %205 = vmatprep.subr.mxu0 0.0
      %206 = vmatpush1.msra.mxu0 %v150
      %207 = vmatprep.subr.mxu0 0.0
      %208 = vmatpush1.msra.mxu0 %v151
      %209 = vmatprep.subr.mxu0 0.0
      %210 = vmatpush1.msra.mxu0 0.0
      %211 = vmatprep.subr.mxu0 0.0
      %212 = vmatpush1.msra.mxu0 0.0
      %213 = vmatprep.subr.mxu0 0.0
      %214 = vmatpush1.msra.mxu0 0.0
      %215 = vmatprep.subr.mxu0 0.0
      %216 = vmatpush1.msra.mxu0 0.0
      %217 = vmatprep.subr.mxu0 0.0
      %218 = vmatpush1.msra.mxu0 0.0
      %219 = vmatprep.subr.mxu0 0.0
      %220 = vmatpush1.msra.mxu0 0.0
      %221 = vmatprep.subr.mxu0 0.0
      %222 = vmatpush1.msra.mxu0 0.0
      %223 = vmatprep.subr.mxu0 0.0
      %224 = vmatpush1.msra.mxu0 0.0
      %225 = vmatprep.subr.mxu0 0.0
      %226 = vmatpush1.msra.mxu0 0.0
      %227 = vmatprep.subr.mxu0 0.0
      %228 = vmatpush1.msra.mxu0 0.0
      %229 = vmatprep.subr.mxu0 0.0
      %230 = vmatpush1.msra.mxu0 0.0
      %231 = vmatprep.subr.mxu0 0.0
      %232 = vmatpush1.msra.mxu0 0.0
      %233 = vmatprep.subr.mxu0 0.0
      %234 = vmatpush1.msra.mxu0 0.0
      %235 = vmatprep.subr.mxu0 0.0
      %236 = vmatpush1.msra.mxu0 0.0
      %237 = vmatprep.subr.mxu0 0.0
      %238 = vmatpush1.msra.mxu0 0.0
      %239 = vmatprep.subr.mxu0 0.0
      %240 = vmatpush1.msra.mxu0 0.0
      %241 = vmatprep.subr.mxu0 0.0
      %242 = vmatpush1.msra.mxu0 0.0
      %243 = vmatprep.subr.mxu0 0.0
      %244 = vmatpush1.msra.mxu0 0.0
      %245 = vmatprep.subr.mxu0 0.0
      %246 = vmatpush1.msra.mxu0 0.0
      %247 = vmatprep.subr.mxu0 0.0
      %248 = vmatpush1.msra.mxu0 0.0
      %249 = vmatprep.subr.mxu0 0.0
      %250 = vmatpush1.msra.mxu0 0.0
      %251 = vmatprep.subr.mxu0 0.0
      %252 = vmatpush1.msra.mxu0 0.0
      %253 = vmatprep.subr.mxu0 0.0
      %254 = vmatpush1.msra.mxu0 0.0
      %255 = vmatprep.subr.mxu0 0.0
      %256 = vmatpush1.msra.mxu0 0.0
      %257 = vmatprep.mubr.f32.mxu0 0.0
      %258 = vmatmul.mubr.f32.gmra.mrb[0].mxu0 %v182
      %v259 = vpop.f32.mrb[0].mxu0
      %v260 = vadd.f32 %v163, %v259
      %v261 = vpop.f32.mrb[0].mxu0
      %262 = vmatprep.mubr.f32.mxu0 0.0
      %263 = vmatmul.mubr.f32.gmra.mrb[0].mxu0 %v185
      %v264 = vpop.f32.mrb[0].mxu0
      %v265 = vadd.f32 %v168, %v264
      %v266 = vpop.f32.mrb[0].mxu0
      %267 = vmatprep.mubr.f32.mxu0 0.0
      %268 = vmatmul.mubr.f32.gmra.mrb[0].mxu0 %v188
      %v269 = vpop.f32.mrb[0].mxu0
      %v270 = vadd.f32 %v173, %v269
      %v271 = vpop.f32.mrb[0].mxu0
      %272 = vmatprep.mubr.f32.mxu0 0.0
      %273 = vmatmul.mubr.f32.gmra.mrb[0].mxu0 %v191
      %v274 = vpop.f32.mrb[0].mxu0
      %v275 = vadd.f32 %v178, %v274
      %v276 = vpop.f32.mrb[0].mxu0
      %277 = vdwg.mxu0
      %vm278 = vcmask 64512
      %279 = vst.msk [vmem:[#allocation2] sm:$0xff] %vm278, 0.0
      %280 = vst.msk [vmem:[#allocation2 + $0x8] sm:$0xff] %vm278, 0.0
      %281 = vst.msk [vmem:[#allocation2 + $0x10] sm:$0xff] %vm278, 0.0
      %282 = vst.msk [vmem:[#allocation2 + $0x18] sm:$0xff] %vm278, 0.0
      %v283 = vld [vmem:[%s1 + $0x1a0] sm:$0xff]
      %v284 = vld [vmem:[%s1 + $0x1a8] sm:$0xff]
      %v285 = vld [vmem:[%s1 + $0x1b0] sm:$0xff]
      %v286 = vld [vmem:[%s1 + $0x1b8] sm:$0xff]
      %v287 = vld [vmem:[%s1] sm:$0xff]
      %v288 = vld [vmem:[%s1 + $0x8] sm:$0xff]
      %v289 = vld [vmem:[%s1 + $0x10] sm:$0xff]
      %v290 = vld [vmem:[%s1 + $0x18] sm:$0xff]
      %295 = vrot.lane.b32.xlu0 %v260, 8
      %v296 = vpop.permute.xlu0 %295
      %297 = vrot.lane.b32.xlu0 %v265, 8
      %v298 = vpop.permute.xlu0 %297
      %299 = vrot.lane.b32.xlu0 %v270, 8
      %v300 = vpop.permute.xlu0 %299
      %301 = vrot.lane.b32.xlu0 %v275, 8
      %v302 = vpop.permute.xlu0 %301
      %vm307 = vcmask 326720
      %308 = vst.msk [vmem:[#allocation2] sm:$0xff] %vm307, %v296
      %309 = vst.msk [vmem:[#allocation2 + $0x8] sm:$0xff] %vm307, %v298
      %310 = vst.msk [vmem:[#allocation2 + $0x10] sm:$0xff] %vm307, %v300
      %311 = vst.msk [vmem:[#allocation2 + $0x18] sm:$0xff] %vm307, %v302
      %v312 = vld [vmem:[#allocation2] sm:$0xff]
      %v313 = vld [vmem:[#allocation2 + $0x8] sm:$0xff]
      %v314 = vld [vmem:[#allocation2 + $0x10] sm:$0xff]
      %v315 = vld [vmem:[#allocation2 + $0x18] sm:$0xff]
      %316 = vrot.lane.b32.xlu0 %v260, 7
      %v317 = vpop.permute.xlu0 %316
      %318 = vrot.lane.b32.xlu0 %v265, 7
      %v319 = vpop.permute.xlu0 %318
      %320 = vrot.lane.b32.xlu0 %v270, 7
      %v321 = vpop.permute.xlu0 %320
      %322 = vrot.lane.b32.xlu0 %v275, 7
      %v323 = vpop.permute.xlu0 %322
      %325 = vset.pattern.permute.xlu0 0
      %326 = vperm.xlu0 %325, %v283
      %v327 = vpop.permute.xlu0 %326
      %330 = vset.pattern.permute.xlu0 0
      %331 = vperm.xlu0 %330, %v284
      %v332 = vpop.permute.xlu0 %331
      %335 = vset.pattern.permute.xlu0 0
      %336 = vperm.xlu0 %335, %v285
      %v337 = vpop.permute.xlu0 %336
      %340 = vset.pattern.permute.xlu0 0
      %341 = vperm.xlu0 %340, %v286
      %v342 = vpop.permute.xlu0 %341
      %348 = vrot.lane.b32.xlu0 %v312, 121
      %v349 = vpop.permute.xlu0 %348
      %350 = vrot.lane.b32.xlu0 %v313, 121
      %v351 = vpop.permute.xlu0 %350
      %352 = vrot.lane.b32.xlu0 %v314, 121
      %v353 = vpop.permute.xlu0 %352
      %354 = vrot.lane.b32.xlu0 %v315, 121
      %v355 = vpop.permute.xlu0 %354
      %356 = vrot.lane.b32.xlu0 %v317, 121
      %v357 = vpop.permute.xlu0 %356
      %358 = vrot.lane.b32.xlu0 %v319, 121
      %v359 = vpop.permute.xlu0 %358
      %360 = vrot.lane.b32.xlu0 %v321, 121
      %v361 = vpop.permute.xlu0 %360
      %362 = vrot.lane.b32.xlu0 %v323, 121
      %v363 = vpop.permute.xlu0 %362
      %v373 = vsel %vm180, %v287, 0
      %v376 = vsel %vm180, %v288, 0
      %v379 = vsel %vm180, %v289, 0
      %v382 = vsel %vm180, %v290, 0
      %384 = vmatprep.subr.mxu0 0.0
      %385 = vmatpush1.msra.mxu0 %v349
      %386 = vmatprep.subr.mxu0 0.0
      %387 = vmatpush1.msra.mxu0 %v351
      %388 = vmatprep.subr.mxu0 0.0
      %389 = vmatpush1.msra.mxu0 %v353
      %390 = vmatprep.subr.mxu0 0.0
      %391 = vmatpush1.msra.mxu0 %v355
      %392 = vmatprep.subr.mxu0 0.0
      %393 = vmatpush1.msra.mxu0 %v357
      %394 = vmatprep.subr.mxu0 0.0
      %395 = vmatpush1.msra.mxu0 %v359
      %396 = vmatprep.subr.mxu0 0.0
      %397 = vmatpush1.msra.mxu0 %v361
      %398 = vmatprep.subr.mxu0 0.0
      %399 = vmatpush1.msra.mxu0 %v363
      %400 = vmatprep.subr.mxu0 0.0
      %401 = vmatpush1.msra.mxu0 0.0
      %402 = vmatprep.subr.mxu0 0.0
      %403 = vmatpush1.msra.mxu0 0.0
      %404 = vmatprep.subr.mxu0 0.0
      %405 = vmatpush1.msra.mxu0 0.0
      %406 = vmatprep.subr.mxu0 0.0
      %407 = vmatpush1.msra.mxu0 0.0
      %408 = vmatprep.subr.mxu0 0.0
      %409 = vmatpush1.msra.mxu0 0.0
      %410 = vmatprep.subr.mxu0 0.0
      %411 = vmatpush1.msra.mxu0 0.0
      %412 = vmatprep.subr.mxu0 0.0
      %413 = vmatpush1.msra.mxu0 0.0
      %414 = vmatprep.subr.mxu0 0.0
      %415 = vmatpush1.msra.mxu0 0.0
      %416 = vmatprep.subr.mxu0 0.0
      %417 = vmatpush1.msra.mxu0 0.0
      %418 = vmatprep.subr.mxu0 0.0
      %419 = vmatpush1.msra.mxu0 0.0
      %420 = vmatprep.subr.mxu0 0.0
      %421 = vmatpush1.msra.mxu0 0.0
      %422 = vmatprep.subr.mxu0 0.0
      %423 = vmatpush1.msra.mxu0 0.0
      %424 = vmatprep.subr.mxu0 0.0
      %425 = vmatpush1.msra.mxu0 0.0
      %426 = vmatprep.subr.mxu0 0.0
      %427 = vmatpush1.msra.mxu0 0.0
      %428 = vmatprep.subr.mxu0 0.0
      %429 = vmatpush1.msra.mxu0 0.0
      %430 = vmatprep.subr.mxu0 0.0
      %431 = vmatpush1.msra.mxu0 0.0
      %432 = vmatprep.subr.mxu0 0.0
      %433 = vmatpush1.msra.mxu0 0.0
      %434 = vmatprep.subr.mxu0 0.0
      %435 = vmatpush1.msra.mxu0 0.0
      %436 = vmatprep.subr.mxu0 0.0
      %437 = vmatpush1.msra.mxu0 0.0
      %438 = vmatprep.subr.mxu0 0.0
      %439 = vmatpush1.msra.mxu0 0.0
      %440 = vmatprep.subr.mxu0 0.0
      %441 = vmatpush1.msra.mxu0 0.0
      %442 = vmatprep.subr.mxu0 0.0
      %443 = vmatpush1.msra.mxu0 0.0
      %444 = vmatprep.subr.mxu0 0.0
      %445 = vmatpush1.msra.mxu0 0.0
      %446 = vmatprep.subr.mxu0 0.0
      %447 = vmatpush1.msra.mxu0 0.0
      %448 = vmatprep.mubr.f32.mxu0 0.0
      %449 = vmatmul.mubr.f32.gmra.mrb[0].mxu0 %v373
      %v450 = vpop.f32.mrb[0].mxu0
      %v451 = vadd.f32 %v327, %v450
      %v452 = vpop.f32.mrb[0].mxu0
      %453 = vmatprep.mubr.f32.mxu0 0.0
      %454 = vmatmul.mubr.f32.gmra.mrb[0].mxu0 %v376
      %v455 = vpop.f32.mrb[0].mxu0
      %v456 = vadd.f32 %v332, %v455
      %v457 = vpop.f32.mrb[0].mxu0
      %458 = vmatprep.mubr.f32.mxu0 0.0
      %459 = vmatmul.mubr.f32.gmra.mrb[0].mxu0 %v379
      %v460 = vpop.f32.mrb[0].mxu0
      %v461 = vadd.f32 %v337, %v460
      %v462 = vpop.f32.mrb[0].mxu0
      %463 = vmatprep.mubr.f32.mxu0 0.0
      %464 = vmatmul.mubr.f32.gmra.mrb[0].mxu0 %v382
      %v465 = vpop.f32.mrb[0].mxu0
      %v466 = vadd.f32 %v342, %v465
      %v467 = vpop.f32.mrb[0].mxu0
      %468 = vdwg.mxu0
      %v469 = vmax.f32 %v451, 0.0
      %v470 = vmax.f32 %v456, 0.0
      %v471 = vmax.f32 %v461, 0.0
      %v472 = vmax.f32 %v466, 0.0
      %v473 = vadd.f32 %v469, %v260
      %v474 = vadd.f32 %v470, %v265
      %v475 = vadd.f32 %v471, %v270
      %v476 = vadd.f32 %v472, %v275
      %v477 = vld [vmem:[%s1 + $0x20] sm:$0xff]
      %v478 = vld [vmem:[%s1 + $0x28] sm:$0xff]
      %v479 = vld [vmem:[%s1 + $0x30] sm:$0xff]
      %v480 = vld [vmem:[%s1 + $0x38] sm:$0xff]
      %485 = vrot.lane.b32.xlu0 %v473, 8
      %v486 = vpop.permute.xlu0 %485
      %487 = vrot.lane.b32.xlu0 %v474, 8
      %v488 = vpop.permute.xlu0 %487
      %489 = vrot.lane.b32.xlu0 %v475, 8
      %v490 = vpop.permute.xlu0 %489
      %491 = vrot.lane.b32.xlu0 %v476, 8
      %v492 = vpop.permute.xlu0 %491
      %497 = vst.msk [vmem:[#allocation2] sm:$0xff] %vm307, %v486
      %498 = vst.msk [vmem:[#allocation2 + $0x8] sm:$0xff] %vm307, %v488
      %499 = vst.msk [vmem:[#allocation2 + $0x10] sm:$0xff] %vm307, %v490
      %500 = vst.msk [vmem:[#allocation2 + $0x18] sm:$0xff] %vm307, %v492
      %v501 = vld [vmem:[#allocation2] sm:$0xff]
      %v502 = vld [vmem:[#allocation2 + $0x8] sm:$0xff]
      %v503 = vld [vmem:[#allocation2 + $0x10] sm:$0xff]
      %v504 = vld [vmem:[#allocation2 + $0x18] sm:$0xff]
      %505 = vrot.lane.b32.xlu0 %v473, 6
      %v506 = vpop.permute.xlu0 %505
      %507 = vrot.lane.b32.xlu0 %v474, 6
      %v508 = vpop.permute.xlu0 %507
      %509 = vrot.lane.b32.xlu0 %v475, 6
      %v510 = vpop.permute.xlu0 %509
      %511 = vrot.lane.b32.xlu0 %v476, 6
      %v512 = vpop.permute.xlu0 %511
      %513 = vset.pattern.permute.xlu0 1
      %514 = vperm.xlu0 %513, %v283
      %v515 = vpop.permute.xlu0 %514
      %517 = vset.pattern.permute.xlu0 1
      %518 = vperm.xlu0 %517, %v284
      %v519 = vpop.permute.xlu0 %518
      %521 = vset.pattern.permute.xlu0 1
      %522 = vperm.xlu0 %521, %v285
      %v523 = vpop.permute.xlu0 %522
      %525 = vset.pattern.permute.xlu0 1
      %526 = vperm.xlu0 %525, %v286
      %v527 = vpop.permute.xlu0 %526
      %533 = vrot.lane.b32.xlu0 %v501, 122
      %v534 = vpop.permute.xlu0 %533
      %535 = vrot.lane.b32.xlu0 %v502, 122
      %v536 = vpop.permute.xlu0 %535
      %537 = vrot.lane.b32.xlu0 %v503, 122
      %v538 = vpop.permute.xlu0 %537
      %539 = vrot.lane.b32.xlu0 %v504, 122
      %v540 = vpop.permute.xlu0 %539
      %541 = vrot.lane.b32.xlu0 %v506, 122
      %v542 = vpop.permute.xlu0 %541
      %543 = vrot.lane.b32.xlu0 %v508, 122
      %v544 = vpop.permute.xlu0 %543
      %545 = vrot.lane.b32.xlu0 %v510, 122
      %v546 = vpop.permute.xlu0 %545
      %547 = vrot.lane.b32.xlu0 %v512, 122
      %v548 = vpop.permute.xlu0 %547
      %v558 = vsel %vm180, %v477, 0
      %v561 = vsel %vm180, %v478, 0
      %v564 = vsel %vm180, %v479, 0
      %v567 = vsel %vm180, %v480, 0
      %569 = vmatprep.subr.mxu0 0.0
      %570 = vmatpush1.msra.mxu0 %v534
      %571 = vmatprep.subr.mxu0 0.0
      %572 = vmatpush1.msra.mxu0 %v536
      %573 = vmatprep.subr.mxu0 0.0
      %574 = vmatpush1.msra.mxu0 %v538
      %575 = vmatprep.subr.mxu0 0.0
      %576 = vmatpush1.msra.mxu0 %v540
      %577 = vmatprep.subr.mxu0 0.0
      %578 = vmatpush1.msra.mxu0 %v542
      %579 = vmatprep.subr.mxu0 0.0
      %580 = vmatpush1.msra.mxu0 %v544
      %581 = vmatprep.subr.mxu0 0.0
      %582 = vmatpush1.msra.mxu0 %v546
      %583 = vmatprep.subr.mxu0 0.0
      %584 = vmatpush1.msra.mxu0 %v548
      %585 = vmatprep.subr.mxu0 0.0
      %586 = vmatpush1.msra.mxu0 0.0
      %587 = vmatprep.subr.mxu0 0.0
      %588 = vmatpush1.msra.mxu0 0.0
      %589 = vmatprep.subr.mxu0 0.0
      %590 = vmatpush1.msra.mxu0 0.0
      %591 = vmatprep.subr.mxu0 0.0
      %592 = vmatpush1.msra.mxu0 0.0
      %593 = vmatprep.subr.mxu0 0.0
      %594 = vmatpush1.msra.mxu0 0.0
      %595 = vmatprep.subr.mxu0 0.0
      %596 = vmatpush1.msra.mxu0 0.0
      %597 = vmatprep.subr.mxu0 0.0
      %598 = vmatpush1.msra.mxu0 0.0
      %599 = vmatprep.subr.mxu0 0.0
      %600 = vmatpush1.msra.mxu0 0.0
      %601 = vmatprep.subr.mxu0 0.0
      %602 = vmatpush1.msra.mxu0 0.0
      %603 = vmatprep.subr.mxu0 0.0
      %604 = vmatpush1.msra.mxu0 0.0
      %605 = vmatprep.subr.mxu0 0.0
      %606 = vmatpush1.msra.mxu0 0.0
      %607 = vmatprep.subr.mxu0 0.0
      %608 = vmatpush1.msra.mxu0 0.0
      %609 = vmatprep.subr.mxu0 0.0
      %610 = vmatpush1.msra.mxu0 0.0
      %611 = vmatprep.subr.mxu0 0.0
      %612 = vmatpush1.msra.mxu0 0.0
      %613 = vmatprep.subr.mxu0 0.0
      %614 = vmatpush1.msra.mxu0 0.0
      %615 = vmatprep.subr.mxu0 0.0
      %616 = vmatpush1.msra.mxu0 0.0
      %617 = vmatprep.subr.mxu0 0.0
      %618 = vmatpush1.msra.mxu0 0.0
      %619 = vmatprep.subr.mxu0 0.0
      %620 = vmatpush1.msra.mxu0 0.0
      %621 = vmatprep.subr.mxu0 0.0
      %622 = vmatpush1.msra.mxu0 0.0
      %623 = vmatprep.subr.mxu0 0.0
      %624 = vmatpush1.msra.mxu0 0.0
      %625 = vmatprep.subr.mxu0 0.0
      %626 = vmatpush1.msra.mxu0 0.0
      %627 = vmatprep.subr.mxu0 0.0
      %628 = vmatpush1.msra.mxu0 0.0
      %629 = vmatprep.subr.mxu0 0.0
      %630 = vmatpush1.msra.mxu0 0.0
      %631 = vmatprep.subr.mxu0 0.0
      %632 = vmatpush1.msra.mxu0 0.0
      %633 = vmatprep.mubr.f32.mxu0 0.0
      %634 = vmatmul.mubr.f32.gmra.mrb[0].mxu0 %v558
      %v635 = vpop.f32.mrb[0].mxu0
      %v636 = vadd.f32 %v515, %v635
      %v637 = vpop.f32.mrb[0].mxu0
      %638 = vmatprep.mubr.f32.mxu0 0.0
      %639 = vmatmul.mubr.f32.gmra.mrb[0].mxu0 %v561
      %v640 = vpop.f32.mrb[0].mxu0
      %v641 = vadd.f32 %v519, %v640
      %v642 = vpop.f32.mrb[0].mxu0
      %643 = vmatprep.mubr.f32.mxu0 0.0
      %644 = vmatmul.mubr.f32.gmra.mrb[0].mxu0 %v564
      %v645 = vpop.f32.mrb[0].mxu0
      %v646 = vadd.f32 %v523, %v645
      %v647 = vpop.f32.mrb[0].mxu0
      %648 = vmatprep.mubr.f32.mxu0 0.0
      %649 = vmatmul.mubr.f32.gmra.mrb[0].mxu0 %v567
      %v650 = vpop.f32.mrb[0].mxu0
      %v651 = vadd.f32 %v527, %v650
      %v652 = vpop.f32.mrb[0].mxu0
      %653 = vdwg.mxu0
      %v654 = vmax.f32 %v636, 0.0
      %v655 = vmax.f32 %v641, 0.0
      %v656 = vmax.f32 %v646, 0.0
      %v657 = vmax.f32 %v651, 0.0
      %v658 = vadd.f32 %v654, %v473
      %v659 = vadd.f32 %v655, %v474
      %v660 = vadd.f32 %v656, %v475
      %v661 = vadd.f32 %v657, %v476
      %v662 = vld [vmem:[%s1 + $0x40] sm:$0xff]
      %v663 = vld [vmem:[%s1 + $0x48] sm:$0xff]
      %v664 = vld [vmem:[%s1 + $0x50] sm:$0xff]
      %v665 = vld [vmem:[%s1 + $0x58] sm:$0xff]
      %670 = vrot.lane.b32.xlu0 %v658, 8
      %v671 = vpop.permute.xlu0 %670
      %672 = vrot.lane.b32.xlu0 %v659, 8
      %v673 = vpop.permute.xlu0 %672
      %674 = vrot.lane.b32.xlu0 %v660, 8
      %v675 = vpop.permute.xlu0 %674
      %676 = vrot.lane.b32.xlu0 %v661, 8
      %v677 = vpop.permute.xlu0 %676
      %682 = vst.msk [vmem:[#allocation2] sm:$0xff] %vm307, %v671
      %683 = vst.msk [vmem:[#allocation2 + $0x8] sm:$0xff] %vm307, %v673
      %684 = vst.msk [vmem:[#allocation2 + $0x10] sm:$0xff] %vm307, %v675
      %685 = vst.msk [vmem:[#allocation2 + $0x18] sm:$0xff] %vm307, %v677
      %v686 = vld [vmem:[#allocation2] sm:$0xff]
      %v687 = vld [vmem:[#allocation2 + $0x8] sm:$0xff]
      %v688 = vld [vmem:[#allocation2 + $0x10] sm:$0xff]
      %v689 = vld [vmem:[#allocation2 + $0x18] sm:$0xff]
      %690 = vrot.lane.b32.xlu0 %v658, 4
      %v691 = vpop.permute.xlu0 %690
      %692 = vrot.lane.b32.xlu0 %v659, 4
      %v693 = vpop.permute.xlu0 %692
      %694 = vrot.lane.b32.xlu0 %v660, 4
      %v695 = vpop.permute.xlu0 %694
      %696 = vrot.lane.b32.xlu0 %v661, 4
      %v697 = vpop.permute.xlu0 %696
      %698 = vset.pattern.permute.xlu0 2
      %699 = vperm.xlu0 %698, %v283
      %v700 = vpop.permute.xlu0 %699
      %702 = vset.pattern.permute.xlu0 2
      %703 = vperm.xlu0 %702, %v284
      %v704 = vpop.permute.xlu0 %703
      %706 = vset.pattern.permute.xlu0 2
      %707 = vperm.xlu0 %706, %v285
      %v708 = vpop.permute.xlu0 %707
      %710 = vset.pattern.permute.xlu0 2
      %711 = vperm.xlu0 %710, %v286
      %v712 = vpop.permute.xlu0 %711
      %718 = vrot.lane.b32.xlu0 %v686, 124
      %v719 = vpop.permute.xlu0 %718
      %720 = vrot.lane.b32.xlu0 %v687, 124
      %v721 = vpop.permute.xlu0 %720
      %722 = vrot.lane.b32.xlu0 %v688, 124
      %v723 = vpop.permute.xlu0 %722
      %724 = vrot.lane.b32.xlu0 %v689, 124
      %v725 = vpop.permute.xlu0 %724
      %726 = vrot.lane.b32.xlu0 %v691, 124
      %v727 = vpop.permute.xlu0 %726
      %728 = vrot.lane.b32.xlu0 %v693, 124
      %v729 = vpop.permute.xlu0 %728
      %730 = vrot.lane.b32.xlu0 %v695, 124
      %v731 = vpop.permute.xlu0 %730
      %732 = vrot.lane.b32.xlu0 %v697, 124
      %v733 = vpop.permute.xlu0 %732
      %v743 = vsel %vm180, %v662, 0
      %v746 = vsel %vm180, %v663, 0
      %v749 = vsel %vm180, %v664, 0
      %v752 = vsel %vm180, %v665, 0
      %754 = vmatprep.subr.mxu0 0.0
      %755 = vmatpush1.msra.mxu0 %v719
      %756 = vmatprep.subr.mxu0 0.0
      %757 = vmatpush1.msra.mxu0 %v721
      %758 = vmatprep.subr.mxu0 0.0
      %759 = vmatpush1.msra.mxu0 %v723
      %760 = vmatprep.subr.mxu0 0.0
      %761 = vmatpush1.msra.mxu0 %v725
      %762 = vmatprep.subr.mxu0 0.0
      %763 = vmatpush1.msra.mxu0 %v727
      %764 = vmatprep.subr.mxu0 0.0
      %765 = vmatpush1.msra.mxu0 %v729
      %766 = vmatprep.subr.mxu0 0.0
      %767 = vmatpush1.msra.mxu0 %v731
      %768 = vmatprep.subr.mxu0 0.0
      %769 = vmatpush1.msra.mxu0 %v733
      %770 = vmatprep.subr.mxu0 0.0
      %771 = vmatpush1.msra.mxu0 0.0
      %772 = vmatprep.subr.mxu0 0.0
      %773 = vmatpush1.msra.mxu0 0.0
      %774 = vmatprep.subr.mxu0 0.0
      %775 = vmatpush1.msra.mxu0 0.0
      %776 = vmatprep.subr.mxu0 0.0
      %777 = vmatpush1.msra.mxu0 0.0
      %778 = vmatprep.subr.mxu0 0.0
      %779 = vmatpush1.msra.mxu0 0.0
      %780 = vmatprep.subr.mxu0 0.0
      %781 = vmatpush1.msra.mxu0 0.0
      %782 = vmatprep.subr.mxu0 0.0
      %783 = vmatpush1.msra.mxu0 0.0
      %784 = vmatprep.subr.mxu0 0.0
      %785 = vmatpush1.msra.mxu0 0.0
      %786 = vmatprep.subr.mxu0 0.0
      %787 = vmatpush1.msra.mxu0 0.0
      %788 = vmatprep.subr.mxu0 0.0
      %789 = vmatpush1.msra.mxu0 0.0
      %790 = vmatprep.subr.mxu0 0.0
      %791 = vmatpush1.msra.mxu0 0.0
      %792 = vmatprep.subr.mxu0 0.0
      %793 = vmatpush1.msra.mxu0 0.0
      %794 = vmatprep.subr.mxu0 0.0
      %795 = vmatpush1.msra.mxu0 0.0
      %796 = vmatprep.subr.mxu0 0.0
      %797 = vmatpush1.msra.mxu0 0.0
      %798 = vmatprep.subr.mxu0 0.0
      %799 = vmatpush1.msra.mxu0 0.0
      %800 = vmatprep.subr.mxu0 0.0
      %801 = vmatpush1.msra.mxu0 0.0
      %802 = vmatprep.subr.mxu0 0.0
      %803 = vmatpush1.msra.mxu0 0.0
      %804 = vmatprep.subr.mxu0 0.0
      %805 = vmatpush1.msra.mxu0 0.0
      %806 = vmatprep.subr.mxu0 0.0
      %807 = vmatpush1.msra.mxu0 0.0
      %808 = vmatprep.subr.mxu0 0.0
      %809 = vmatpush1.msra.mxu0 0.0
      %810 = vmatprep.subr.mxu0 0.0
      %811 = vmatpush1.msra.mxu0 0.0
      %812 = vmatprep.subr.mxu0 0.0
      %813 = vmatpush1.msra.mxu0 0.0
      %814 = vmatprep.subr.mxu0 0.0
      %815 = vmatpush1.msra.mxu0 0.0
      %816 = vmatprep.subr.mxu0 0.0
      %817 = vmatpush1.msra.mxu0 0.0
      %818 = vmatprep.mubr.f32.mxu0 0.0
      %819 = vmatmul.mubr.f32.gmra.mrb[0].mxu0 %v743
      %v820 = vpop.f32.mrb[0].mxu0
      %v821 = vadd.f32 %v700, %v820
      %v822 = vpop.f32.mrb[0].mxu0
      %823 = vmatprep.mubr.f32.mxu0 0.0
      %824 = vmatmul.mubr.f32.gmra.mrb[0].mxu0 %v746
      %v825 = vpop.f32.mrb[0].mxu0
      %v826 = vadd.f32 %v704, %v825
      %v827 = vpop.f32.mrb[0].mxu0
      %828 = vmatprep.mubr.f32.mxu0 0.0
      %829 = vmatmul.mubr.f32.gmra.mrb[0].mxu0 %v749
      %v830 = vpop.f32.mrb[0].mxu0
      %v831 = vadd.f32 %v708, %v830
      %v832 = vpop.f32.mrb[0].mxu0
      %833 = vmatprep.mubr.f32.mxu0 0.0
      %834 = vmatmul.mubr.f32.gmra.mrb[0].mxu0 %v752
      %v835 = vpop.f32.mrb[0].mxu0
      %v836 = vadd.f32 %v712, %v835
      %v837 = vpop.f32.mrb[0].mxu0
      %838 = vdwg.mxu0
      %v839 = vmax.f32 %v821, 0.0
      %v840 = vmax.f32 %v826, 0.0
      %v841 = vmax.f32 %v831, 0.0
      %v842 = vmax.f32 %v836, 0.0
      %v843 = vadd.f32 %v839, %v658
      %v844 = vadd.f32 %v840, %v659
      %v845 = vadd.f32 %v841, %v660
      %v846 = vadd.f32 %v842, %v661
      %v847 = vld [vmem:[%s1 + $0x60] sm:$0xff]
      %v848 = vld [vmem:[%s1 + $0x68] sm:$0xff]
      %v849 = vld [vmem:[%s1 + $0x70] sm:$0xff]
      %v850 = vld [vmem:[%s1 + $0x78] sm:$0xff]
      %855 = vrot.lane.b32.xlu0 %v843, 8
      %v856 = vpop.permute.xlu0 %855
      %857 = vrot.lane.b32.xlu0 %v844, 8
      %v858 = vpop.permute.xlu0 %857
      %859 = vrot.lane.b32.xlu0 %v845, 8
      %v860 = vpop.permute.xlu0 %859
      %861 = vrot.lane.b32.xlu0 %v846, 8
      %v862 = vpop.permute.xlu0 %861
      %867 = vst.msk [vmem:[#allocation2] sm:$0xff] %vm307, %v856
      %868 = vst.msk [vmem:[#allocation2 + $0x8] sm:$0xff] %vm307, %v858
      %869 = vst.msk [vmem:[#allocation2 + $0x10] sm:$0xff] %vm307, %v860
      %870 = vst.msk [vmem:[#allocation2 + $0x18] sm:$0xff] %vm307, %v862
      %v871 = vld [vmem:[#allocation2] sm:$0xff]
      %v872 = vld [vmem:[#allocation2 + $0x8] sm:$0xff]
      %v873 = vld [vmem:[#allocation2 + $0x10] sm:$0xff]
      %v874 = vld [vmem:[#allocation2 + $0x18] sm:$0xff]
      %875 = vset.pattern.permute.xlu0 3
      %876 = vperm.xlu0 %875, %v283
      %v877 = vpop.permute.xlu0 %876
      %879 = vset.pattern.permute.xlu0 3
      %880 = vperm.xlu0 %879, %v284
      %v881 = vpop.permute.xlu0 %880
      %883 = vset.pattern.permute.xlu0 3
      %884 = vperm.xlu0 %883, %v285
      %v885 = vpop.permute.xlu0 %884
      %887 = vset.pattern.permute.xlu0 3
      %888 = vperm.xlu0 %887, %v286
      %v889 = vpop.permute.xlu0 %888
      %v892 = vsel %vm180, %v847, 0
      %v895 = vsel %vm180, %v848, 0
      %v898 = vsel %vm180, %v849, 0
      %v901 = vsel %vm180, %v850, 0
      %903 = vmatprep.subr.mxu0 0.0
      %904 = vmatpush1.msra.mxu0 %v871
      %905 = vmatprep.subr.mxu0 0.0
      %906 = vmatpush1.msra.mxu0 %v872
      %907 = vmatprep.subr.mxu0 0.0
      %908 = vmatpush1.msra.mxu0 %v873
      %909 = vmatprep.subr.mxu0 0.0
      %910 = vmatpush1.msra.mxu0 %v874
      %911 = vmatprep.subr.mxu0 0.0
      %912 = vmatpush1.msra.mxu0 %v843
      %913 = vmatprep.subr.mxu0 0.0
      %914 = vmatpush1.msra.mxu0 %v844
      %915 = vmatprep.subr.mxu0 0.0
      %916 = vmatpush1.msra.mxu0 %v845
      %917 = vmatprep.subr.mxu0 0.0
      %918 = vmatpush1.msra.mxu0 %v846
      %919 = vmatprep.subr.mxu0 0.0
      %920 = vmatpush1.msra.mxu0 0.0
      %921 = vmatprep.subr.mxu0 0.0
      %922 = vmatpush1.msra.mxu0 0.0
      %923 = vmatprep.subr.mxu0 0.0
      %924 = vmatpush1.msra.mxu0 0.0
      %925 = vmatprep.subr.mxu0 0.0
      %926 = vmatpush1.msra.mxu0 0.0
      %927 = vmatprep.subr.mxu0 0.0
      %928 = vmatpush1.msra.mxu0 0.0
      %929 = vmatprep.subr.mxu0 0.0
      %930 = vmatpush1.msra.mxu0 0.0
      %931 = vmatprep.subr.mxu0 0.0
      %932 = vmatpush1.msra.mxu0 0.0
      %933 = vmatprep.subr.mxu0 0.0
      %934 = vmatpush1.msra.mxu0 0.0
      %935 = vmatprep.subr.mxu0 0.0
      %936 = vmatpush1.msra.mxu0 0.0
      %937 = vmatprep.subr.mxu0 0.0
      %938 = vmatpush1.msra.mxu0 0.0
      %939 = vmatprep.subr.mxu0 0.0
      %940 = vmatpush1.msra.mxu0 0.0
      %941 = vmatprep.subr.mxu0 0.0
      %942 = vmatpush1.msra.mxu0 0.0
      %943 = vmatprep.subr.mxu0 0.0
      %944 = vmatpush1.msra.mxu0 0.0
      %945 = vmatprep.subr.mxu0 0.0
      %946 = vmatpush1.msra.mxu0 0.0
      %947 = vmatprep.subr.mxu0 0.0
      %948 = vmatpush1.msra.mxu0 0.0
      %949 = vmatprep.subr.mxu0 0.0
      %950 = vmatpush1.msra.mxu0 0.0
      %951 = vmatprep.subr.mxu0 0.0
      %952 = vmatpush1.msra.mxu0 0.0
      %953 = vmatprep.subr.mxu0 0.0
      %954 = vmatpush1.msra.mxu0 0.0
      %955 = vmatprep.subr.mxu0 0.0
      %956 = vmatpush1.msra.mxu0 0.0
      %957 = vmatprep.subr.mxu0 0.0
      %958 = vmatpush1.msra.mxu0 0.0
      %959 = vmatprep.subr.mxu0 0.0
      %960 = vmatpush1.msra.mxu0 0.0
      %961 = vmatprep.subr.mxu0 0.0
      %962 = vmatpush1.msra.mxu0 0.0
      %963 = vmatprep.subr.mxu0 0.0
      %964 = vmatpush1.msra.mxu0 0.0
      %965 = vmatprep.subr.mxu0 0.0
      %966 = vmatpush1.msra.mxu0 0.0
      %967 = vmatprep.mubr.f32.mxu0 0.0
      %968 = vmatmul.mubr.f32.gmra.mrb[0].mxu0 %v892
      %v969 = vpop.f32.mrb[0].mxu0
      %v970 = vadd.f32 %v877, %v969
      %v971 = vpop.f32.mrb[0].mxu0
      %972 = vmatprep.mubr.f32.mxu0 0.0
      %973 = vmatmul.mubr.f32.gmra.mrb[0].mxu0 %v895
      %v974 = vpop.f32.mrb[0].mxu0
      %v975 = vadd.f32 %v881, %v974
      %v976 = vpop.f32.mrb[0].mxu0
      %977 = vmatprep.mubr.f32.mxu0 0.0
      %978 = vmatmul.mubr.f32.gmra.mrb[0].mxu0 %v898
      %v979 = vpop.f32.mrb[0].mxu0
      %v980 = vadd.f32 %v885, %v979
      %v981 = vpop.f32.mrb[0].mxu0
      %982 = vmatprep.mubr.f32.mxu0 0.0
      %983 = vmatmul.mubr.f32.gmra.mrb[0].mxu0 %v901
      %v984 = vpop.f32.mrb[0].mxu0
      %v985 = vadd.f32 %v889, %v984
      %v986 = vpop.f32.mrb[0].mxu0
      %987 = vdwg.mxu0
      %v988 = vmax.f32 %v970, 0.0
      %v989 = vmax.f32 %v975, 0.0
      %v990 = vmax.f32 %v980, 0.0
      %v991 = vmax.f32 %v985, 0.0
      %v992 = vadd.f32 %v988, %v843
      %v993 = vadd.f32 %v989, %v844
      %v994 = vadd.f32 %v990, %v845
      %v995 = vadd.f32 %v991, %v846
      %v996 = vld [vmem:[%s1 + $0x80] sm:$0xff]
      %v997 = vld [vmem:[%s1 + $0x88] sm:$0xff]
      %v998 = vld [vmem:[%s1 + $0x90] sm:$0xff]
      %v999 = vld [vmem:[%s1 + $0x98] sm:$0xff]
      %1004 = vrot.lane.b32.xlu0 %v992, 8
      %v1005 = vpop.permute.xlu0 %1004
      %1006 = vrot.lane.b32.xlu0 %v993, 8
      %v1007 = vpop.permute.xlu0 %1006
      %1008 = vrot.lane.b32.xlu0 %v994, 8
      %v1009 = vpop.permute.xlu0 %1008
      %1010 = vrot.lane.b32.xlu0 %v995, 8
      %v1011 = vpop.permute.xlu0 %1010
      %1016 = vst.msk [vmem:[#allocation2] sm:$0xff] %vm307, %v1005
      %1017 = vst.msk [vmem:[#allocation2 + $0x8] sm:$0xff] %vm307, %v1007
      %1018 = vst.msk [vmem:[#allocation2 + $0x10] sm:$0xff] %vm307, %v1009
      %1019 = vst.msk [vmem:[#allocation2 + $0x18] sm:$0xff] %vm307, %v1011
      %v1020 = vld [vmem:[#allocation2] sm:$0xff]
      %v1021 = vld [vmem:[#allocation2 + $0x8] sm:$0xff]
      %v1022 = vld [vmem:[#allocation2 + $0x10] sm:$0xff]
      %v1023 = vld [vmem:[#allocation2 + $0x18] sm:$0xff]
      %1024 = vrot.lane.b32.xlu0 %v992, 7
      %v1025 = vpop.permute.xlu0 %1024
      %1026 = vrot.lane.b32.xlu0 %v993, 7
      %v1027 = vpop.permute.xlu0 %1026
      %1028 = vrot.lane.b32.xlu0 %v994, 7
      %v1029 = vpop.permute.xlu0 %1028
      %1030 = vrot.lane.b32.xlu0 %v995, 7
      %v1031 = vpop.permute.xlu0 %1030
      %1032 = vset.pattern.permute.xlu0 4
      %1033 = vperm.xlu0 %1032, %v283
      %v1034 = vpop.permute.xlu0 %1033
      %1036 = vset.pattern.permute.xlu0 4
      %1037 = vperm.xlu0 %1036, %v284
      %v1038 = vpop.permute.xlu0 %1037
      %1040 = vset.pattern.permute.xlu0 4
      %1041 = vperm.xlu0 %1040, %v285
      %v1042 = vpop.permute.xlu0 %1041
      %1044 = vset.pattern.permute.xlu0 4
      %1045 = vperm.xlu0 %1044, %v286
      %v1046 = vpop.permute.xlu0 %1045
      %1052 = vrot.lane.b32.xlu0 %v1020, 121
      %v1053 = vpop.permute.xlu0 %1052
      %1054 = vrot.lane.b32.xlu0 %v1021, 121
      %v1055 = vpop.permute.xlu0 %1054
      %1056 = vrot.lane.b32.xlu0 %v1022, 121
      %v1057 = vpop.permute.xlu0 %1056
      %1058 = vrot.lane.b32.xlu0 %v1023, 121
      %v1059 = vpop.permute.xlu0 %1058
      %1060 = vrot.lane.b32.xlu0 %v1025, 121
      %v1061 = vpop.permute.xlu0 %1060
      %1062 = vrot.lane.b32.xlu0 %v1027, 121
      %v1063 = vpop.permute.xlu0 %1062
      %1064 = vrot.lane.b32.xlu0 %v1029, 121
      %v1065 = vpop.permute.xlu0 %1064
      %1066 = vrot.lane.b32.xlu0 %v1031, 121
      %v1067 = vpop.permute.xlu0 %1066
      %v1077 = vsel %vm180, %v996, 0
      %v1080 = vsel %vm180, %v997, 0
      %v1083 = vsel %vm180, %v998, 0
      %v1086 = vsel %vm180, %v999, 0
      %1088 = vmatprep.subr.mxu0 0.0
      %1089 = vmatpush1.msra.mxu0 %v1053
      %1090 = vmatprep.subr.mxu0 0.0
      %1091 = vmatpush1.msra.mxu0 %v1055
      %1092 = vmatprep.subr.mxu0 0.0
      %1093 = vmatpush1.msra.mxu0 %v1057
      %1094 = vmatprep.subr.mxu0 0.0
      %1095 = vmatpush1.msra.mxu0 %v1059
      %1096 = vmatprep.subr.mxu0 0.0
      %1097 = vmatpush1.msra.mxu0 %v1061
      %1098 = vmatprep.subr.mxu0 0.0
      %1099 = vmatpush1.msra.mxu0 %v1063
      %1100 = vmatprep.subr.mxu0 0.0
      %1101 = vmatpush1.msra.mxu0 %v1065
      %1102 = vmatprep.subr.mxu0 0.0
      %1103 = vmatpush1.msra.mxu0 %v1067
      %1104 = vmatprep.subr.mxu0 0.0
      %1105 = vmatpush1.msra.mxu0 0.0
      %1106 = vmatprep.subr.mxu0 0.0
      %1107 = vmatpush1.msra.mxu0 0.0
      %1108 = vmatprep.subr.mxu0 0.0
      %1109 = vmatpush1.msra.mxu0 0.0
      %1110 = vmatprep.subr.mxu0 0.0
      %1111 = vmatpush1.msra.mxu0 0.0
      %1112 = vmatprep.subr.mxu0 0.0
      %1113 = vmatpush1.msra.mxu0 0.0
      %1114 = vmatprep.subr.mxu0 0.0
      %1115 = vmatpush1.msra.mxu0 0.0
      %1116 = vmatprep.subr.mxu0 0.0
      %1117 = vmatpush1.msra.mxu0 0.0
      %1118 = vmatprep.subr.mxu0 0.0
      %1119 = vmatpush1.msra.mxu0 0.0
      %1120 = vmatprep.subr.mxu0 0.0
      %1121 = vmatpush1.msra.mxu0 0.0
      %1122 = vmatprep.subr.mxu0 0.0
      %1123 = vmatpush1.msra.mxu0 0.0
      %1124 = vmatprep.subr.mxu0 0.0
      %1125 = vmatpush1.msra.mxu0 0.0
      %1126 = vmatprep.subr.mxu0 0.0
      %1127 = vmatpush1.msra.mxu0 0.0
      %1128 = vmatprep.subr.mxu0 0.0
      %1129 = vmatpush1.msra.mxu0 0.0
      %1130 = vmatprep.subr.mxu0 0.0
      %1131 = vmatpush1.msra.mxu0 0.0
      %1132 = vmatprep.subr.mxu0 0.0
      %1133 = vmatpush1.msra.mxu0 0.0
      %1134 = vmatprep.subr.mxu0 0.0
      %1135 = vmatpush1.msra.mxu0 0.0
      %1136 = vmatprep.subr.mxu0 0.0
      %1137 = vmatpush1.msra.mxu0 0.0
      %1138 = vmatprep.subr.mxu0 0.0
      %1139 = vmatpush1.msra.mxu0 0.0
      %1140 = vmatprep.subr.mxu0 0.0
      %1141 = vmatpush1.msra.mxu0 0.0
      %1142 = vmatprep.subr.mxu0 0.0
      %1143 = vmatpush1.msra.mxu0 0.0
      %1144 = vmatprep.subr.mxu0 0.0
      %1145 = vmatpush1.msra.mxu0 0.0
      %1146 = vmatprep.subr.mxu0 0.0
      %1147 = vmatpush1.msra.mxu0 0.0
      %1148 = vmatprep.subr.mxu0 0.0
      %1149 = vmatpush1.msra.mxu0 0.0
      %1150 = vmatprep.subr.mxu0 0.0
      %1151 = vmatpush1.msra.mxu0 0.0
      %1152 = vmatprep.mubr.f32.mxu0 0.0
      %1153 = vmatmul.mubr.f32.gmra.mrb[0].mxu0 %v1077
      %v1154 = vpop.f32.mrb[0].mxu0
      %v1155 = vadd.f32 %v1034, %v1154
      %v1156 = vpop.f32.mrb[0].mxu0
      %1157 = vmatprep.mubr.f32.mxu0 0.0
      %1158 = vmatmul.mubr.f32.gmra.mrb[0].mxu0 %v1080
      %v1159 = vpop.f32.mrb[0].mxu0
      %v1160 = vadd.f32 %v1038, %v1159
      %v1161 = vpop.f32.mrb[0].mxu0
      %1162 = vmatprep.mubr.f32.mxu0 0.0
      %1163 = vmatmul.mubr.f32.gmra.mrb[0].mxu0 %v1083
      %v1164 = vpop.f32.mrb[0].mxu0
      %v1165 = vadd.f32 %v1042, %v1164
      %v1166 = vpop.f32.mrb[0].mxu0
      %1167 = vmatprep.mubr.f32.mxu0 0.0
      %1168 = vmatmul.mubr.f32.gmra.mrb[0].mxu0 %v1086
      %v1169 = vpop.f32.mrb[0].mxu0
      %v1170 = vadd.f32 %v1046, %v1169
      %v1171 = vpop.f32.mrb[0].mxu0
      %1172 = vdwg.mxu0
      %v1173 = vmax.f32 %v1155, 0.0
      %v1174 = vmax.f32 %v1160, 0.0
      %v1175 = vmax.f32 %v1165, 0.0
      %v1176 = vmax.f32 %v1170, 0.0
      %v1177 = vadd.f32 %v1173, %v992
      %v1178 = vadd.f32 %v1174, %v993
      %v1179 = vadd.f32 %v1175, %v994
      %v1180 = vadd.f32 %v1176, %v995
      %v1181 = vld [vmem:[%s1 + $0xa0] sm:$0xff]
      %v1182 = vld [vmem:[%s1 + $0xa8] sm:$0xff]
      %v1183 = vld [vmem:[%s1 + $0xb0] sm:$0xff]
      %v1184 = vld [vmem:[%s1 + $0xb8] sm:$0xff]
      %1189 = vrot.lane.b32.xlu0 %v1177, 8
      %v1190 = vpop.permute.xlu0 %1189
      %1191 = vrot.lane.b32.xlu0 %v1178, 8
      %v1192 = vpop.permute.xlu0 %1191
      %1193 = vrot.lane.b32.xlu0 %v1179, 8
      %v1194 = vpop.permute.xlu0 %1193
      %1195 = vrot.lane.b32.xlu0 %v1180, 8
      %v1196 = vpop.permute.xlu0 %1195
      %1201 = vst.msk [vmem:[#allocation2] sm:$0xff] %vm307, %v1190
      %1202 = vst.msk [vmem:[#allocation2 + $0x8] sm:$0xff] %vm307, %v1192
      %1203 = vst.msk [vmem:[#allocation2 + $0x10] sm:$0xff] %vm307, %v1194
      %1204 = vst.msk [vmem:[#allocation2 + $0x18] sm:$0xff] %vm307, %v1196
      %v1205 = vld [vmem:[#allocation2] sm:$0xff]
      %v1206 = vld [vmem:[#allocation2 + $0x8] sm:$0xff]
      %v1207 = vld [vmem:[#allocation2 + $0x10] sm:$0xff]
      %v1208 = vld [vmem:[#allocation2 + $0x18] sm:$0xff]
      %1209 = vrot.lane.b32.xlu0 %v1177, 6
      %v1210 = vpop.permute.xlu0 %1209
      %1211 = vrot.lane.b32.xlu0 %v1178, 6
      %v1212 = vpop.permute.xlu0 %1211
      %1213 = vrot.lane.b32.xlu0 %v1179, 6
      %v1214 = vpop.permute.xlu0 %1213
      %1215 = vrot.lane.b32.xlu0 %v1180, 6
      %v1216 = vpop.permute.xlu0 %1215
      %1217 = vset.pattern.permute.xlu0 5
      %1218 = vperm.xlu0 %1217, %v283
      %v1219 = vpop.permute.xlu0 %1218
      %1221 = vset.pattern.permute.xlu0 5
      %1222 = vperm.xlu0 %1221, %v284
      %v1223 = vpop.permute.xlu0 %1222
      %1225 = vset.pattern.permute.xlu0 5
      %1226 = vperm.xlu0 %1225, %v285
      %v1227 = vpop.permute.xlu0 %1226
      %1229 = vset.pattern.permute.xlu0 5
      %1230 = vperm.xlu0 %1229, %v286
      %v1231 = vpop.permute.xlu0 %1230
      %1237 = vrot.lane.b32.xlu0 %v1205, 122
      %v1238 = vpop.permute.xlu0 %1237
      %1239 = vrot.lane.b32.xlu0 %v1206, 122
      %v1240 = vpop.permute.xlu0 %1239
      %1241 = vrot.lane.b32.xlu0 %v1207, 122
      %v1242 = vpop.permute.xlu0 %1241
      %1243 = vrot.lane.b32.xlu0 %v1208, 122
      %v1244 = vpop.permute.xlu0 %1243
      %1245 = vrot.lane.b32.xlu0 %v1210, 122
      %v1246 = vpop.permute.xlu0 %1245
      %1247 = vrot.lane.b32.xlu0 %v1212, 122
      %v1248 = vpop.permute.xlu0 %1247
      %1249 = vrot.lane.b32.xlu0 %v1214, 122
      %v1250 = vpop.permute.xlu0 %1249
      %1251 = vrot.lane.b32.xlu0 %v1216, 122
      %v1252 = vpop.permute.xlu0 %1251
      %v1262 = vsel %vm180, %v1181, 0
      %v1265 = vsel %vm180, %v1182, 0
      %v1268 = vsel %vm180, %v1183, 0
      %v1271 = vsel %vm180, %v1184, 0
      %1273 = vmatprep.subr.mxu0 0.0
      %1274 = vmatpush1.msra.mxu0 %v1238
      %1275 = vmatprep.subr.mxu0 0.0
      %1276 = vmatpush1.msra.mxu0 %v1240
      %1277 = vmatprep.subr.mxu0 0.0
      %1278 = vmatpush1.msra.mxu0 %v1242
      %1279 = vmatprep.subr.mxu0 0.0
      %1280 = vmatpush1.msra.mxu0 %v1244
      %1281 = vmatprep.subr.mxu0 0.0
      %1282 = vmatpush1.msra.mxu0 %v1246
      %1283 = vmatprep.subr.mxu0 0.0
      %1284 = vmatpush1.msra.mxu0 %v1248
      %1285 = vmatprep.subr.mxu0 0.0
      %1286 = vmatpush1.msra.mxu0 %v1250
      %1287 = vmatprep.subr.mxu0 0.0
      %1288 = vmatpush1.msra.mxu0 %v1252
      %1289 = vmatprep.subr.mxu0 0.0
      %1290 = vmatpush1.msra.mxu0 0.0
      %1291 = vmatprep.subr.mxu0 0.0
      %1292 = vmatpush1.msra.mxu0 0.0
      %1293 = vmatprep.subr.mxu0 0.0
      %1294 = vmatpush1.msra.mxu0 0.0
      %1295 = vmatprep.subr.mxu0 0.0
      %1296 = vmatpush1.msra.mxu0 0.0
      %1297 = vmatprep.subr.mxu0 0.0
      %1298 = vmatpush1.msra.mxu0 0.0
      %1299 = vmatprep.subr.mxu0 0.0
      %1300 = vmatpush1.msra.mxu0 0.0
      %1301 = vmatprep.subr.mxu0 0.0
      %1302 = vmatpush1.msra.mxu0 0.0
      %1303 = vmatprep.subr.mxu0 0.0
      %1304 = vmatpush1.msra.mxu0 0.0
      %1305 = vmatprep.subr.mxu0 0.0
      %1306 = vmatpush1.msra.mxu0 0.0
      %1307 = vmatprep.subr.mxu0 0.0
      %1308 = vmatpush1.msra.mxu0 0.0
      %1309 = vmatprep.subr.mxu0 0.0
      %1310 = vmatpush1.msra.mxu0 0.0
      %1311 = vmatprep.subr.mxu0 0.0
      %1312 = vmatpush1.msra.mxu0 0.0
      %1313 = vmatprep.subr.mxu0 0.0
      %1314 = vmatpush1.msra.mxu0 0.0
      %1315 = vmatprep.subr.mxu0 0.0
      %1316 = vmatpush1.msra.mxu0 0.0
      %1317 = vmatprep.subr.mxu0 0.0
      %1318 = vmatpush1.msra.mxu0 0.0
      %1319 = vmatprep.subr.mxu0 0.0
      %1320 = vmatpush1.msra.mxu0 0.0
      %1321 = vmatprep.subr.mxu0 0.0
      %1322 = vmatpush1.msra.mxu0 0.0
      %1323 = vmatprep.subr.mxu0 0.0
      %1324 = vmatpush1.msra.mxu0 0.0
      %1325 = vmatprep.subr.mxu0 0.0
      %1326 = vmatpush1.msra.mxu0 0.0
      %1327 = vmatprep.subr.mxu0 0.0
      %1328 = vmatpush1.msra.mxu0 0.0
      %1329 = vmatprep.subr.mxu0 0.0
      %1330 = vmatpush1.msra.mxu0 0.0
      %1331 = vmatprep.subr.mxu0 0.0
      %1332 = vmatpush1.msra.mxu0 0.0
      %1333 = vmatprep.subr.mxu0 0.0
      %1334 = vmatpush1.msra.mxu0 0.0
      %1335 = vmatprep.subr.mxu0 0.0
      %1336 = vmatpush1.msra.mxu0 0.0
      %1337 = vmatprep.mubr.f32.mxu0 0.0
      %1338 = vmatmul.mubr.f32.gmra.mrb[0].mxu0 %v1262
      %v1339 = vpop.f32.mrb[0].mxu0
      %v1340 = vadd.f32 %v1219, %v1339
      %v1341 = vpop.f32.mrb[0].mxu0
      %1342 = vmatprep.mubr.f32.mxu0 0.0
      %1343 = vmatmul.mubr.f32.gmra.mrb[0].mxu0 %v1265
      %v1344 = vpop.f32.mrb[0].mxu0
      %v1345 = vadd.f32 %v1223, %v1344
      %v1346 = vpop.f32.mrb[0].mxu0
      %1347 = vmatprep.mubr.f32.mxu0 0.0
      %1348 = vmatmul.mubr.f32.gmra.mrb[0].mxu0 %v1268
      %v1349 = vpop.f32.mrb[0].mxu0
      %v1350 = vadd.f32 %v1227, %v1349
      %v1351 = vpop.f32.mrb[0].mxu0
      %1352 = vmatprep.mubr.f32.mxu0 0.0
      %1353 = vmatmul.mubr.f32.gmra.mrb[0].mxu0 %v1271
      %v1354 = vpop.f32.mrb[0].mxu0
      %v1355 = vadd.f32 %v1231, %v1354
      %v1356 = vpop.f32.mrb[0].mxu0
      %1357 = vdwg.mxu0
      %v1358 = vmax.f32 %v1340, 0.0
      %v1359 = vmax.f32 %v1345, 0.0
      %v1360 = vmax.f32 %v1350, 0.0
      %v1361 = vmax.f32 %v1355, 0.0
      %v1362 = vadd.f32 %v1358, %v1177
      %v1363 = vadd.f32 %v1359, %v1178
      %v1364 = vadd.f32 %v1360, %v1179
      %v1365 = vadd.f32 %v1361, %v1180
      %v1366 = vld [vmem:[%s1 + $0xc0] sm:$0xff]
      %v1367 = vld [vmem:[%s1 + $0xc8] sm:$0xff]
      %v1368 = vld [vmem:[%s1 + $0xd0] sm:$0xff]
      %v1369 = vld [vmem:[%s1 + $0xd8] sm:$0xff]
      %1374 = vrot.lane.b32.xlu0 %v1362, 8
      %v1375 = vpop.permute.xlu0 %1374
      %1376 = vrot.lane.b32.xlu0 %v1363, 8
      %v1377 = vpop.permute.xlu0 %1376
      %1378 = vrot.lane.b32.xlu0 %v1364, 8
      %v1379 = vpop.permute.xlu0 %1378
      %1380 = vrot.lane.b32.xlu0 %v1365, 8
      %v1381 = vpop.permute.xlu0 %1380
      %1386 = vst.msk [vmem:[#allocation2] sm:$0xff] %vm307, %v1375
      %1387 = vst.msk [vmem:[#allocation2 + $0x8] sm:$0xff] %vm307, %v1377
      %1388 = vst.msk [vmem:[#allocation2 + $0x10] sm:$0xff] %vm307, %v1379
      %1389 = vst.msk [vmem:[#allocation2 + $0x18] sm:$0xff] %vm307, %v1381
      %v1390 = vld [vmem:[#allocation2] sm:$0xff]
      %v1391 = vld [vmem:[#allocation2 + $0x8] sm:$0xff]
      %v1392 = vld [vmem:[#allocation2 + $0x10] sm:$0xff]
      %v1393 = vld [vmem:[#allocation2 + $0x18] sm:$0xff]
      %1394 = vrot.lane.b32.xlu0 %v1362, 4
      %v1395 = vpop.permute.xlu0 %1394
      %1396 = vrot.lane.b32.xlu0 %v1363, 4
      %v1397 = vpop.permute.xlu0 %1396
      %1398 = vrot.lane.b32.xlu0 %v1364, 4
      %v1399 = vpop.permute.xlu0 %1398
      %1400 = vrot.lane.b32.xlu0 %v1365, 4
      %v1401 = vpop.permute.xlu0 %1400
      %1402 = vset.pattern.permute.xlu0 6
      %1403 = vperm.xlu0 %1402, %v283
      %v1404 = vpop.permute.xlu0 %1403
      %1406 = vset.pattern.permute.xlu0 6
      %1407 = vperm.xlu0 %1406, %v284
      %v1408 = vpop.permute.xlu0 %1407
      %1410 = vset.pattern.permute.xlu0 6
      %1411 = vperm.xlu0 %1410, %v285
      %v1412 = vpop.permute.xlu0 %1411
      %1414 = vset.pattern.permute.xlu0 6
      %1415 = vperm.xlu0 %1414, %v286
      %v1416 = vpop.permute.xlu0 %1415
      %1422 = vrot.lane.b32.xlu0 %v1390, 124
      %v1423 = vpop.permute.xlu0 %1422
      %1424 = vrot.lane.b32.xlu0 %v1391, 124
      %v1425 = vpop.permute.xlu0 %1424
      %1426 = vrot.lane.b32.xlu0 %v1392, 124
      %v1427 = vpop.permute.xlu0 %1426
      %1428 = vrot.lane.b32.xlu0 %v1393, 124
      %v1429 = vpop.permute.xlu0 %1428
      %1430 = vrot.lane.b32.xlu0 %v1395, 124
      %v1431 = vpop.permute.xlu0 %1430
      %1432 = vrot.lane.b32.xlu0 %v1397, 124
      %v1433 = vpop.permute.xlu0 %1432
      %1434 = vrot.lane.b32.xlu0 %v1399, 124
      %v1435 = vpop.permute.xlu0 %1434
      %1436 = vrot.lane.b32.xlu0 %v1401, 124
      %v1437 = vpop.permute.xlu0 %1436
      %v1447 = vsel %vm180, %v1366, 0
      %v1450 = vsel %vm180, %v1367, 0
      %v1453 = vsel %vm180, %v1368, 0
      %v1456 = vsel %vm180, %v1369, 0
      %1458 = vmatprep.subr.mxu0 0.0
      %1459 = vmatpush1.msra.mxu0 %v1423
      %1460 = vmatprep.subr.mxu0 0.0
      %1461 = vmatpush1.msra.mxu0 %v1425
      %1462 = vmatprep.subr.mxu0 0.0
      %1463 = vmatpush1.msra.mxu0 %v1427
      %1464 = vmatprep.subr.mxu0 0.0
      %1465 = vmatpush1.msra.mxu0 %v1429
      %1466 = vmatprep.subr.mxu0 0.0
      %1467 = vmatpush1.msra.mxu0 %v1431
      %1468 = vmatprep.subr.mxu0 0.0
      %1469 = vmatpush1.msra.mxu0 %v1433
      %1470 = vmatprep.subr.mxu0 0.0
      %1471 = vmatpush1.msra.mxu0 %v1435
      %1472 = vmatprep.subr.mxu0 0.0
      %1473 = vmatpush1.msra.mxu0 %v1437
      %1474 = vmatprep.subr.mxu0 0.0
      %1475 = vmatpush1.msra.mxu0 0.0
      %1476 = vmatprep.subr.mxu0 0.0
      %1477 = vmatpush1.msra.mxu0 0.0
      %1478 = vmatprep.subr.mxu0 0.0
      %1479 = vmatpush1.msra.mxu0 0.0
      %1480 = vmatprep.subr.mxu0 0.0
      %1481 = vmatpush1.msra.mxu0 0.0
      %1482 = vmatprep.subr.mxu0 0.0
      %1483 = vmatpush1.msra.mxu0 0.0
      %1484 = vmatprep.subr.mxu0 0.0
      %1485 = vmatpush1.msra.mxu0 0.0
      %1486 = vmatprep.subr.mxu0 0.0
      %1487 = vmatpush1.msra.mxu0 0.0
      %1488 = vmatprep.subr.mxu0 0.0
      %1489 = vmatpush1.msra.mxu0 0.0
      %1490 = vmatprep.subr.mxu0 0.0
      %1491 = vmatpush1.msra.mxu0 0.0
      %1492 = vmatprep.subr.mxu0 0.0
      %1493 = vmatpush1.msra.mxu0 0.0
      %1494 = vmatprep.subr.mxu0 0.0
      %1495 = vmatpush1.msra.mxu0 0.0
      %1496 = vmatprep.subr.mxu0 0.0
      %1497 = vmatpush1.msra.mxu0 0.0
      %1498 = vmatprep.subr.mxu0 0.0
      %1499 = vmatpush1.msra.mxu0 0.0
      %1500 = vmatprep.subr.mxu0 0.0
      %1501 = vmatpush1.msra.mxu0 0.0
      %1502 = vmatprep.subr.mxu0 0.0
      %1503 = vmatpush1.msra.mxu0 0.0
      %1504 = vmatprep.subr.mxu0 0.0
      %1505 = vmatpush1.msra.mxu0 0.0
      %1506 = vmatprep.subr.mxu0 0.0
      %1507 = vmatpush1.msra.mxu0 0.0
      %1508 = vmatprep.subr.mxu0 0.0
      %1509 = vmatpush1.msra.mxu0 0.0
      %1510 = vmatprep.subr.mxu0 0.0
      %1511 = vmatpush1.msra.mxu0 0.0
      %1512 = vmatprep.subr.mxu0 0.0
      %1513 = vmatpush1.msra.mxu0 0.0
      %1514 = vmatprep.subr.mxu0 0.0
      %1515 = vmatpush1.msra.mxu0 0.0
      %1516 = vmatprep.subr.mxu0 0.0
      %1517 = vmatpush1.msra.mxu0 0.0
      %1518 = vmatprep.subr.mxu0 0.0
      %1519 = vmatpush1.msra.mxu0 0.0
      %1520 = vmatprep.subr.mxu0 0.0
      %1521 = vmatpush1.msra.mxu0 0.0
      %1522 = vmatprep.mubr.f32.mxu0 0.0
      %1523 = vmatmul.mubr.f32.gmra.mrb[0].mxu0 %v1447
      %v1524 = vpop.f32.mrb[0].mxu0
      %v1525 = vadd.f32 %v1404, %v1524
      %v1526 = vpop.f32.mrb[0].mxu0
      %1527 = vmatprep.mubr.f32.mxu0 0.0
      %1528 = vmatmul.mubr.f32.gmra.mrb[0].mxu0 %v1450
      %v1529 = vpop.f32.mrb[0].mxu0
      %v1530 = vadd.f32 %v1408, %v1529
      %v1531 = vpop.f32.mrb[0].mxu0
      %1532 = vmatprep.mubr.f32.mxu0 0.0
      %1533 = vmatmul.mubr.f32.gmra.mrb[0].mxu0 %v1453
      %v1534 = vpop.f32.mrb[0].mxu0
      %v1535 = vadd.f32 %v1412, %v1534
      %v1536 = vpop.f32.mrb[0].mxu0
      %1537 = vmatprep.mubr.f32.mxu0 0.0
      %1538 = vmatmul.mubr.f32.gmra.mrb[0].mxu0 %v1456
      %v1539 = vpop.f32.mrb[0].mxu0
      %v1540 = vadd.f32 %v1416, %v1539
      %v1541 = vpop.f32.mrb[0].mxu0
      %1542 = vdwg.mxu0
      %v1543 = vmax.f32 %v1525, 0.0
      %v1544 = vmax.f32 %v1530, 0.0
      %v1545 = vmax.f32 %v1535, 0.0
      %v1546 = vmax.f32 %v1540, 0.0
      %v1547 = vadd.f32 %v1543, %v1362
      %v1548 = vadd.f32 %v1544, %v1363
      %v1549 = vadd.f32 %v1545, %v1364
      %v1550 = vadd.f32 %v1546, %v1365
      %v1551 = vld [vmem:[%s1 + $0xe0] sm:$0xff]
      %v1552 = vld [vmem:[%s1 + $0xe8] sm:$0xff]
      %v1553 = vld [vmem:[%s1 + $0xf0] sm:$0xff]
      %v1554 = vld [vmem:[%s1 + $0xf8] sm:$0xff]
      %1559 = vrot.lane.b32.xlu0 %v1547, 8
      %v1560 = vpop.permute.xlu0 %1559
      %1561 = vrot.lane.b32.xlu0 %v1548, 8
      %v1562 = vpop.permute.xlu0 %1561
      %1563 = vrot.lane.b32.xlu0 %v1549, 8
      %v1564 = vpop.permute.xlu0 %1563
      %1565 = vrot.lane.b32.xlu0 %v1550, 8
      %v1566 = vpop.permute.xlu0 %1565
      %1571 = vst.msk [vmem:[#allocation2] sm:$0xff] %vm307, %v1560
      %1572 = vst.msk [vmem:[#allocation2 + $0x8] sm:$0xff] %vm307, %v1562
      %1573 = vst.msk [vmem:[#allocation2 + $0x10] sm:$0xff] %vm307, %v1564
      %1574 = vst.msk [vmem:[#allocation2 + $0x18] sm:$0xff] %vm307, %v1566
      %v1575 = vld [vmem:[#allocation2] sm:$0xff]
      %v1576 = vld [vmem:[#allocation2 + $0x8] sm:$0xff]
      %v1577 = vld [vmem:[#allocation2 + $0x10] sm:$0xff]
      %v1578 = vld [vmem:[#allocation2 + $0x18] sm:$0xff]
      %1579 = vset.pattern.permute.xlu0 7
      %1580 = vperm.xlu0 %1579, %v283
      %v1581 = vpop.permute.xlu0 %1580
      %1583 = vset.pattern.permute.xlu0 7
      %1584 = vperm.xlu0 %1583, %v284
      %v1585 = vpop.permute.xlu0 %1584
      %1587 = vset.pattern.permute.xlu0 7
      %1588 = vperm.xlu0 %1587, %v285
      %v1589 = vpop.permute.xlu0 %1588
      %1591 = vset.pattern.permute.xlu0 7
      %1592 = vperm.xlu0 %1591, %v286
      %v1593 = vpop.permute.xlu0 %1592
      %v1596 = vsel %vm180, %v1551, 0
      %v1599 = vsel %vm180, %v1552, 0
      %v1602 = vsel %vm180, %v1553, 0
      %v1605 = vsel %vm180, %v1554, 0
      %1607 = vmatprep.subr.mxu0 0.0
      %1608 = vmatpush1.msra.mxu0 %v1575
      %1609 = vmatprep.subr.mxu0 0.0
      %1610 = vmatpush1.msra.mxu0 %v1576
      %1611 = vmatprep.subr.mxu0 0.0
      %1612 = vmatpush1.msra.mxu0 %v1577
      %1613 = vmatprep.subr.mxu0 0.0
      %1614 = vmatpush1.msra.mxu0 %v1578
      %1615 = vmatprep.subr.mxu0 0.0
      %1616 = vmatpush1.msra.mxu0 %v1547
      %1617 = vmatprep.subr.mxu0 0.0
      %1618 = vmatpush1.msra.mxu0 %v1548
      %1619 = vmatprep.subr.mxu0 0.0
      %1620 = vmatpush1.msra.mxu0 %v1549
      %1621 = vmatprep.subr.mxu0 0.0
      %1622 = vmatpush1.msra.mxu0 %v1550
      %1623 = vmatprep.subr.mxu0 0.0
      %1624 = vmatpush1.msra.mxu0 0.0
      %1625 = vmatprep.subr.mxu0 0.0
      %1626 = vmatpush1.msra.mxu0 0.0
      %1627 = vmatprep.subr.mxu0 0.0
      %1628 = vmatpush1.msra.mxu0 0.0
      %1629 = vmatprep.subr.mxu0 0.0
      %1630 = vmatpush1.msra.mxu0 0.0
      %1631 = vmatprep.subr.mxu0 0.0
      %1632 = vmatpush1.msra.mxu0 0.0
      %1633 = vmatprep.subr.mxu0 0.0
      %1634 = vmatpush1.msra.mxu0 0.0
      %1635 = vmatprep.subr.mxu0 0.0
      %1636 = vmatpush1.msra.mxu0 0.0
      %1637 = vmatprep.subr.mxu0 0.0
      %1638 = vmatpush1.msra.mxu0 0.0
      %1639 = vmatprep.subr.mxu0 0.0
      %1640 = vmatpush1.msra.mxu0 0.0
      %1641 = vmatprep.subr.mxu0 0.0
      %1642 = vmatpush1.msra.mxu0 0.0
      %1643 = vmatprep.subr.mxu0 0.0
      %1644 = vmatpush1.msra.mxu0 0.0
      %1645 = vmatprep.subr.mxu0 0.0
      %1646 = vmatpush1.msra.mxu0 0.0
      %1647 = vmatprep.subr.mxu0 0.0
      %1648 = vmatpush1.msra.mxu0 0.0
      %1649 = vmatprep.subr.mxu0 0.0
      %1650 = vmatpush1.msra.mxu0 0.0
      %1651 = vmatprep.subr.mxu0 0.0
      %1652 = vmatpush1.msra.mxu0 0.0
      %1653 = vmatprep.subr.mxu0 0.0
      %1654 = vmatpush1.msra.mxu0 0.0
      %1655 = vmatprep.subr.mxu0 0.0
      %1656 = vmatpush1.msra.mxu0 0.0
      %1657 = vmatprep.subr.mxu0 0.0
      %1658 = vmatpush1.msra.mxu0 0.0
      %1659 = vmatprep.subr.mxu0 0.0
      %1660 = vmatpush1.msra.mxu0 0.0
      %1661 = vmatprep.subr.mxu0 0.0
      %1662 = vmatpush1.msra.mxu0 0.0
      %1663 = vmatprep.subr.mxu0 0.0
      %1664 = vmatpush1.msra.mxu0 0.0
      %1665 = vmatprep.subr.mxu0 0.0
      %1666 = vmatpush1.msra.mxu0 0.0
      %1667 = vmatprep.subr.mxu0 0.0
      %1668 = vmatpush1.msra.mxu0 0.0
      %1669 = vmatprep.subr.mxu0 0.0
      %1670 = vmatpush1.msra.mxu0 0.0
      %1671 = vmatprep.mubr.f32.mxu0 0.0
      %1672 = vmatmul.mubr.f32.gmra.mrb[0].mxu0 %v1596
      %v1673 = vpop.f32.mrb[0].mxu0
      %v1674 = vadd.f32 %v1581, %v1673
      %v1675 = vpop.f32.mrb[0].mxu0
      %1676 = vmatprep.mubr.f32.mxu0 0.0
      %1677 = vmatmul.mubr.f32.gmra.mrb[0].mxu0 %v1599
      %v1678 = vpop.f32.mrb[0].mxu0
      %v1679 = vadd.f32 %v1585, %v1678
      %v1680 = vpop.f32.mrb[0].mxu0
      %1681 = vmatprep.mubr.f32.mxu0 0.0
      %1682 = vmatmul.mubr.f32.gmra.mrb[0].mxu0 %v1602
      %v1683 = vpop.f32.mrb[0].mxu0
      %v1684 = vadd.f32 %v1589, %v1683
      %v1685 = vpop.f32.mrb[0].mxu0
      %1686 = vmatprep.mubr.f32.mxu0 0.0
      %1687 = vmatmul.mubr.f32.gmra.mrb[0].mxu0 %v1605
      %v1688 = vpop.f32.mrb[0].mxu0
      %v1689 = vadd.f32 %v1593, %v1688
      %v1690 = vpop.f32.mrb[0].mxu0
      %1691 = vdwg.mxu0
      %v1692 = vmax.f32 %v1674, 0.0
      %v1693 = vmax.f32 %v1679, 0.0
      %v1694 = vmax.f32 %v1684, 0.0
      %v1695 = vmax.f32 %v1689, 0.0
      %v1696 = vadd.f32 %v1692, %v1547
      %v1697 = vadd.f32 %v1693, %v1548
      %v1698 = vadd.f32 %v1694, %v1549
      %v1699 = vadd.f32 %v1695, %v1550
      %v1700 = vld [vmem:[%s1 + $0x120] sm:$0xff]
      %v1701 = vld [vmem:[%s1 + $0x128] sm:$0xff]
      %v1702 = vld [vmem:[%s1 + $0x130] sm:$0xff]
      %v1703 = vld [vmem:[%s1 + $0x138] sm:$0xff]
      %v1704 = vld [vmem:[%s1 + $0x1c0] sm:$0xff]
      %v1705 = vld [vmem:[%s1 + $0x1c8] sm:$0xff]
      %v1706 = vld [vmem:[%s1 + $0x1d0] sm:$0xff]
      %v1707 = vld [vmem:[%s1 + $0x1d8] sm:$0xff]
      %v1708 = vld [vmem:[%s1 + $0x140] sm:$0xff]
      %v1709 = vld [vmem:[%s1 + $0x148] sm:$0xff]
      %v1710 = vld [vmem:[%s1 + $0x150] sm:$0xff]
      %v1711 = vld [vmem:[%s1 + $0x158] sm:$0xff]
      %v1712 = vld [vmem:[%s1 + $0x160] sm:$0xff]
      %v1713 = vld [vmem:[%s1 + $0x168] sm:$0xff]
      %v1714 = vld [vmem:[%s1 + $0x170] sm:$0xff]
      %v1715 = vld [vmem:[%s1 + $0x178] sm:$0xff]
      %v1716 = vld [vmem:[%s1 + $0x1e0] sm:$0xff]
      %v1717 = vld [vmem:[%s1 + $0x1e8] sm:$0xff]
      %v1718 = vld [vmem:[%s1 + $0x1f0] sm:$0xff]
      %v1719 = vld [vmem:[%s1 + $0x1f8] sm:$0xff]
      %v1720 = vld [vmem:[%s1 + $0x200] sm:$0xff]
      %v1721 = vld [vmem:[%s1 + $0x208] sm:$0xff]
      %v1722 = vld [vmem:[%s1 + $0x210] sm:$0xff]
      %v1723 = vld [vmem:[%s1 + $0x218] sm:$0xff]
      %1725 = vset.pattern.permute.xlu0 0
      %1726 = vperm.xlu0 %1725, %v1704
      %v1727 = vpop.permute.xlu0 %1726
      %1730 = vset.pattern.permute.xlu0 0
      %1731 = vperm.xlu0 %1730, %v1705
      %v1732 = vpop.permute.xlu0 %1731
      %1735 = vset.pattern.permute.xlu0 0
      %1736 = vperm.xlu0 %1735, %v1706
      %v1737 = vpop.permute.xlu0 %1736
      %1740 = vset.pattern.permute.xlu0 0
      %1741 = vperm.xlu0 %1740, %v1707
      %v1742 = vpop.permute.xlu0 %1741
      %vm1744 = vcmask 261120
      %v1746 = vsel %vm1744, %v1700, 0
      %v1749 = vsel %vm1744, %v1701, 0
      %v1752 = vsel %vm1744, %v1702, 0
      %v1755 = vsel %vm1744, %v1703, 0
      %1757 = vmatprep.subr.mxu0 0.0
      %1758 = vmatpush1.msra.mxu0 %v1696
      %1759 = vmatprep.subr.mxu0 0.0
      %1760 = vmatpush1.msra.mxu0 %v1697
      %1761 = vmatprep.subr.mxu0 0.0
      %1762 = vmatpush1.msra.mxu0 %v1698
      %1763 = vmatprep.subr.mxu0 0.0
      %1764 = vmatpush1.msra.mxu0 %v1699
      %1765 = vmatprep.subr.mxu0 0.0
      %1766 = vmatpush1.msra.mxu0 0.0
      %1767 = vmatprep.subr.mxu0 0.0
      %1768 = vmatpush1.msra.mxu0 0.0
      %1769 = vmatprep.subr.mxu0 0.0
      %1770 = vmatpush1.msra.mxu0 0.0
      %1771 = vmatprep.subr.mxu0 0.0
      %1772 = vmatpush1.msra.mxu0 0.0
      %1773 = vmatprep.subr.mxu0 0.0
      %1774 = vmatpush1.msra.mxu0 0.0
      %1775 = vmatprep.subr.mxu0 0.0
      %1776 = vmatpush1.msra.mxu0 0.0
      %1777 = vmatprep.subr.mxu0 0.0
      %1778 = vmatpush1.msra.mxu0 0.0
      %1779 = vmatprep.subr.mxu0 0.0
      %1780 = vmatpush1.msra.mxu0 0.0
      %1781 = vmatprep.subr.mxu0 0.0
      %1782 = vmatpush1.msra.mxu0 0.0
      %1783 = vmatprep.subr.mxu0 0.0
      %1784 = vmatpush1.msra.mxu0 0.0
      %1785 = vmatprep.subr.mxu0 0.0
      %1786 = vmatpush1.msra.mxu0 0.0
      %1787 = vmatprep.subr.mxu0 0.0
      %1788 = vmatpush1.msra.mxu0 0.0
      %1789 = vmatprep.subr.mxu0 0.0
      %1790 = vmatpush1.msra.mxu0 0.0
      %1791 = vmatprep.subr.mxu0 0.0
      %1792 = vmatpush1.msra.mxu0 0.0
      %1793 = vmatprep.subr.mxu0 0.0
      %1794 = vmatpush1.msra.mxu0 0.0
      %1795 = vmatprep.subr.mxu0 0.0
      %1796 = vmatpush1.msra.mxu0 0.0
      %1797 = vmatprep.subr.mxu0 0.0
      %1798 = vmatpush1.msra.mxu0 0.0
      %1799 = vmatprep.subr.mxu0 0.0
      %1800 = vmatpush1.msra.mxu0 0.0
      %1801 = vmatprep.subr.mxu0 0.0
      %1802 = vmatpush1.msra.mxu0 0.0
      %1803 = vmatprep.subr.mxu0 0.0
      %1804 = vmatpush1.msra.mxu0 0.0
      %1805 = vmatprep.subr.mxu0 0.0
      %1806 = vmatpush1.msra.mxu0 0.0
      %1807 = vmatprep.subr.mxu0 0.0
      %1808 = vmatpush1.msra.mxu0 0.0
      %1809 = vmatprep.subr.mxu0 0.0
      %1810 = vmatpush1.msra.mxu0 0.0
      %1811 = vmatprep.subr.mxu0 0.0
      %1812 = vmatpush1.msra.mxu0 0.0
      %1813 = vmatprep.subr.mxu0 0.0
      %1814 = vmatpush1.msra.mxu0 0.0
      %1815 = vmatprep.subr.mxu0 0.0
      %1816 = vmatpush1.msra.mxu0 0.0
      %1817 = vmatprep.subr.mxu0 0.0
      %1818 = vmatpush1.msra.mxu0 0.0
      %1819 = vmatprep.subr.mxu0 0.0
      %1820 = vmatpush1.msra.mxu0 0.0
      %1821 = vmatprep.mubr.f32.mxu0 0.0
      %1822 = vmatmul.mubr.f32.gmra.mrb[0].mxu0 %v1746
      %v1823 = vpop.f32.mrb[0].mxu0
      %v1824 = vadd.f32 %v1727, %v1823
      %v1825 = vpop.f32.mrb[0].mxu0
      %1826 = vmatprep.mubr.f32.mxu0 0.0
      %1827 = vmatmul.mubr.f32.gmra.mrb[0].mxu0 %v1749
      %v1828 = vpop.f32.mrb[0].mxu0
      %v1829 = vadd.f32 %v1732, %v1828
      %v1830 = vpop.f32.mrb[0].mxu0
      %1831 = vmatprep.mubr.f32.mxu0 0.0
      %1832 = vmatmul.mubr.f32.gmra.mrb[0].mxu0 %v1752
      %v1833 = vpop.f32.mrb[0].mxu0
      %v1834 = vadd.f32 %v1737, %v1833
      %v1835 = vpop.f32.mrb[0].mxu0
      %1836 = vmatprep.mubr.f32.mxu0 0.0
      %1837 = vmatmul.mubr.f32.gmra.mrb[0].mxu0 %v1755
      %v1838 = vpop.f32.mrb[0].mxu0
      %v1839 = vadd.f32 %v1742, %v1838
      %v1840 = vpop.f32.mrb[0].mxu0
      %1841 = vdwg.mxu0
      %v1842 = vmax.f32 %v1824, 0.0
      %v1843 = vmax.f32 %v1829, 0.0
      %v1844 = vmax.f32 %v1834, 0.0
      %v1845 = vmax.f32 %v1839, 0.0
      %1847 = vset.pattern.permute.xlu0 0
      %1848 = vperm.xlu0 %1847, %v1716
      %v1849 = vpop.permute.xlu0 %1848
      %1852 = vset.pattern.permute.xlu0 0
      %1853 = vperm.xlu0 %1852, %v1717
      %v1854 = vpop.permute.xlu0 %1853
      %1857 = vset.pattern.permute.xlu0 0
      %1858 = vperm.xlu0 %1857, %v1718
      %v1859 = vpop.permute.xlu0 %1858
      %1862 = vset.pattern.permute.xlu0 0
      %1863 = vperm.xlu0 %1862, %v1719
      %v1864 = vpop.permute.xlu0 %1863
      %1867 = vset.pattern.permute.xlu0 0
      %1868 = vperm.xlu0 %1867, %v1720
      %v1869 = vpop.permute.xlu0 %1868
      %1872 = vset.pattern.permute.xlu0 0
      %1873 = vperm.xlu0 %1872, %v1721
      %v1874 = vpop.permute.xlu0 %1873
      %1877 = vset.pattern.permute.xlu0 0
      %1878 = vperm.xlu0 %1877, %v1722
      %v1879 = vpop.permute.xlu0 %1878
      %1882 = vset.pattern.permute.xlu0 0
      %1883 = vperm.xlu0 %1882, %v1723
      %v1884 = vpop.permute.xlu0 %1883
      %v1887 = vsel %vm1744, %v1708, 0
      %v1890 = vsel %vm1744, %v1709, 0
      %v1893 = vsel %vm1744, %v1710, 0
      %v1896 = vsel %vm1744, %v1711, 0
      %v1899 = vsel %vm1744, %v1712, 0
      %v1902 = vsel %vm1744, %v1713, 0
      %v1905 = vsel %vm1744, %v1714, 0
      %v1908 = vsel %vm1744, %v1715, 0
      %1910 = vmatprep.subr.mxu0 0.0
      %1911 = vmatpush1.msra.mxu0 %v1842
      %1912 = vmatprep.subr.mxu0 0.0
      %1913 = vmatpush1.msra.mxu0 %v1843
      %1914 = vmatprep.subr.mxu0 0.0
      %1915 = vmatpush1.msra.mxu0 %v1844
      %1916 = vmatprep.subr.mxu0 0.0
      %1917 = vmatpush1.msra.mxu0 %v1845
      %1918 = vmatprep.subr.mxu0 0.0
      %1919 = vmatpush1.msra.mxu0 0.0
      %1920 = vmatprep.subr.mxu0 0.0
      %1921 = vmatpush1.msra.mxu0 0.0
      %1922 = vmatprep.subr.mxu0 0.0
      %1923 = vmatpush1.msra.mxu0 0.0
      %1924 = vmatprep.subr.mxu0 0.0
      %1925 = vmatpush1.msra.mxu0 0.0
      %1926 = vmatprep.subr.mxu0 0.0
      %1927 = vmatpush1.msra.mxu0 0.0
      %1928 = vmatprep.subr.mxu0 0.0
      %1929 = vmatpush1.msra.mxu0 0.0
      %1930 = vmatprep.subr.mxu0 0.0
      %1931 = vmatpush1.msra.mxu0 0.0
      %1932 = vmatprep.subr.mxu0 0.0
      %1933 = vmatpush1.msra.mxu0 0.0
      %1934 = vmatprep.subr.mxu0 0.0
      %1935 = vmatpush1.msra.mxu0 0.0
      %1936 = vmatprep.subr.mxu0 0.0
      %1937 = vmatpush1.msra.mxu0 0.0
      %1938 = vmatprep.subr.mxu0 0.0
      %1939 = vmatpush1.msra.mxu0 0.0
      %1940 = vmatprep.subr.mxu0 0.0
      %1941 = vmatpush1.msra.mxu0 0.0
      %1942 = vmatprep.subr.mxu0 0.0
      %1943 = vmatpush1.msra.mxu0 0.0
      %1944 = vmatprep.subr.mxu0 0.0
      %1945 = vmatpush1.msra.mxu0 0.0
      %1946 = vmatprep.subr.mxu0 0.0
      %1947 = vmatpush1.msra.mxu0 0.0
      %1948 = vmatprep.subr.mxu0 0.0
      %1949 = vmatpush1.msra.mxu0 0.0
      %1950 = vmatprep.subr.mxu0 0.0
      %1951 = vmatpush1.msra.mxu0 0.0
      %1952 = vmatprep.subr.mxu0 0.0
      %1953 = vmatpush1.msra.mxu0 0.0
      %1954 = vmatprep.subr.mxu0 0.0
      %1955 = vmatpush1.msra.mxu0 0.0
      %1956 = vmatprep.subr.mxu0 0.0
      %1957 = vmatpush1.msra.mxu0 0.0
      %1958 = vmatprep.subr.mxu0 0.0
      %1959 = vmatpush1.msra.mxu0 0.0
      %1960 = vmatprep.subr.mxu0 0.0
      %1961 = vmatpush1.msra.mxu0 0.0
      %1962 = vmatprep.subr.mxu0 0.0
      %1963 = vmatpush1.msra.mxu0 0.0
      %1964 = vmatprep.subr.mxu0 0.0
      %1965 = vmatpush1.msra.mxu0 0.0
      %1966 = vmatprep.subr.mxu0 0.0
      %1967 = vmatpush1.msra.mxu0 0.0
      %1968 = vmatprep.subr.mxu0 0.0
      %1969 = vmatpush1.msra.mxu0 0.0
      %1970 = vmatprep.subr.mxu0 0.0
      %1971 = vmatpush1.msra.mxu0 0.0
      %1972 = vmatprep.subr.mxu0 0.0
      %1973 = vmatpush1.msra.mxu0 0.0
      %1974 = vmatprep.mubr.f32.mxu0 0.0
      %1975 = vmatmul.mubr.f32.gmra.mrb[0].mxu0 %v1887
      %v1976 = vpop.f32.mrb[0].mxu0
      %v1977 = vadd.f32 %v1849, %v1976
      %v1978 = vpop.f32.mrb[0].mxu0
      %1979 = vmatprep.mubr.f32.mxu0 0.0
      %1980 = vmatmul.mubr.f32.gmra.mrb[0].mxu0 %v1890
      %v1981 = vpop.f32.mrb[0].mxu0
      %v1982 = vadd.f32 %v1854, %v1981
      %v1983 = vpop.f32.mrb[0].mxu0
      %1984 = vmatprep.mubr.f32.mxu0 0.0
      %1985 = vmatmul.mubr.f32.gmra.mrb[0].mxu0 %v1893
      %v1986 = vpop.f32.mrb[0].mxu0
      %v1987 = vadd.f32 %v1859, %v1986
      %v1988 = vpop.f32.mrb[0].mxu0
      %1989 = vmatprep.mubr.f32.mxu0 0.0
      %1990 = vmatmul.mubr.f32.gmra.mrb[0].mxu0 %v1896
      %v1991 = vpop.f32.mrb[0].mxu0
      %v1992 = vadd.f32 %v1864, %v1991
      %v1993 = vpop.f32.mrb[0].mxu0
      %1994 = vmatprep.mubr.f32.mxu0 0.0
      %1995 = vmatmul.mubr.f32.gmra.mrb[0].mxu0 %v1899
      %v1996 = vpop.f32.mrb[0].mxu0
      %v1997 = vadd.f32 %v1869, %v1996
      %v1998 = vpop.f32.mrb[0].mxu0
      %1999 = vmatprep.mubr.f32.mxu0 0.0
      %2000 = vmatmul.mubr.f32.gmra.mrb[0].mxu0 %v1902
      %v2001 = vpop.f32.mrb[0].mxu0
      %v2002 = vadd.f32 %v1874, %v2001
      %v2003 = vpop.f32.mrb[0].mxu0
      %2004 = vmatprep.mubr.f32.mxu0 0.0
      %2005 = vmatmul.mubr.f32.gmra.mrb[0].mxu0 %v1905
      %v2006 = vpop.f32.mrb[0].mxu0
      %v2007 = vadd.f32 %v1879, %v2006
      %v2008 = vpop.f32.mrb[0].mxu0
      %2009 = vmatprep.mubr.f32.mxu0 0.0
      %2010 = vmatmul.mubr.f32.gmra.mrb[0].mxu0 %v1908
      %v2011 = vpop.f32.mrb[0].mxu0
      %v2012 = vadd.f32 %v1884, %v2011
      %v2013 = vpop.f32.mrb[0].mxu0
      %2014 = vdwg.mxu0
      %2015 = vst.msk [vmem:[%s143] sm:$0xff] %vm1744, %v1977
      %2016 = vst.msk [vmem:[%s143 + $0x8] sm:$0xff] %vm1744, %v1982
      %2017 = vst.msk [vmem:[%s143 + $0x10] sm:$0xff] %vm1744, %v1987
      %2018 = vst.msk [vmem:[%s143 + $0x18] sm:$0xff] %vm1744, %v1992
      %2019 = vst.msk [vmem:[%s143 + $0x20] sm:$0xff] %vm1744, %v1997
      %2020 = vst.msk [vmem:[%s143 + $0x28] sm:$0xff] %vm1744, %v2002
      %2021 = vst.msk [vmem:[%s143 + $0x30] sm:$0xff] %vm1744, %v2007
      %2022 = vst.msk [vmem:[%s143 + $0x38] sm:$0xff] %vm1744, %v2012
      %p2023 = scmp.lt.s32.totalorder %s13, 1
      %s2024 = scalar_select %p2023, %s13, 1
      %s2025 = smul.addr %s2024, 8
      %s2026 = smul.addr %s2025, 8
      %s2027 = scalar_lea.vmem %s2, %s2026
      // Predicated region
      $region29: #{tpu_custom_call.1} parent=27 // pred_check
        %p2028 = pneg %p78
      $region30: #{tpu_custom_call.1} parent=27 // pred_check_branch
        %2030 = sbr.rel (%p2028) target = $region32
      $region31: #{tpu_custom_call.1} parent=27 // pred_region
        _
      $region32: #{tpu_custom_call.1} parent=27 // pred_fallthru
        _
    $region28: #{tpu_custom_call.1} parent=5 // pred_fallthru
      _
    %p2031 = scmp.le.s32.totalorder 2, %s8
    // Predicated region
    $region33: #{tpu_custom_call.1} parent=5 // pred_check
      %p2032 = pneg %p2031
    $region34: #{tpu_custom_call.1} parent=5 // pred_check_branch
      %2034 = sbr.rel (%p2032) target = $region36
    $region35: #{tpu_custom_call.1} parent=5 // pred_region
      %s2035 = ssub.s32 %s8, 2
      // Predicated region
      $region37: #{tpu_custom_call.1} parent=35 // pred_check
        %p2036 = pneg %p84
      $region38: #{tpu_custom_call.1} parent=35 // pred_check_branch
        %2038 = sbr.rel (%p2036) target = $region40
      $region39: #{tpu_custom_call.1} parent=35 // pred_region
        %p2039 = scmp.lt.s32.totalorder %s14, 1
        %s2040 = scalar_select %p2039, %s14, 1
        %s2041 = smul.addr %s2040, 8
        %s2042 = smul.addr %s2041, 8
        %s2043 = scalar_lea.vmem %s2, %s2042
      $region40: #{tpu_custom_call.1} parent=35 // pred_fallthru
        _
    $region36: #{tpu_custom_call.1} parent=5 // pred_fallthru
      _
  $region6: #{tpu_custom_call.1} parent=0 // loop_footer
    %s12 = sadd.s32 1, %s8
  $region7: #{tpu_custom_call.1} parent=0 // loop_footer_branch
    %7 = sbr.rel target = $region3
  $region8: #{tpu_custom_call.1} parent=0 // loop_exit
    _

</llo_original>
